<compile_context>
chip_gen: v6e
topology: v6e:2x2x1
jax: 0.10.0
libtpu: 0.0.40
codegen_flags: <defaults>
</compile_context>

<pallas_src>
import jax
import jax.numpy as jnp
from jax.experimental import pallas as pl
from jax.experimental.pallas import tpu as pltpu


AUDIO_DIM = 13
VIDEO_DIM = 1 * 6 * 6           # 36
AV_DIM = AUDIO_DIM + VIDEO_DIM  # 49
AV_PAD = 64                     # padded fused audio|video width (aligned DMA)
EMB_DIM = 4096
BRANCH_DIM = 64
CAT_DIM = 256                   # 64 + 64 + 128
HID = 128
OUT_DIM = 7
OUT_PAD = 128                   # lane-dense padded head width


def multimodal_kernel(av_ref, emb_ref,
                      wav_ref, bav_ref,
                      we_ref, be_ref,
                      wc_ref, bc_ref,
                      wo_ref, bo_ref,
                      out_ref):
    f32 = jnp.float32
    bf16 = jnp.bfloat16

    # Inputs arrive straight from HBM in their original dtype (f32 here);
    # cast to bf16 only at the MXU boundary (no wrapper-side HBM cast pass).
    av_in = av_ref[...].astype(bf16)
    emb_in = emb_ref[...].astype(bf16)

    # Fused audio|video branch: block-diagonal weight gives
    # [relu(audio@Wa+ba) | relu(video@Wv+bv)] in one K=64 matmul -> (TB, 128)
    av = jnp.maximum(
        jnp.dot(av_in, wav_ref[...], preferred_element_type=f32)
        + bav_ref[...], 0.0)

    # embedding branch: relu(emb @ We + be) -> (TB, 128)
    emb = jnp.maximum(
        jnp.dot(emb_in, we_ref[...], preferred_element_type=f32)
        + be_ref[...], 0.0)

    # torch.cat([audio_out, video_out, emb_out], dim=1) -> (TB, 256) bf16,
    # then a single K=256 matmul for combined_fc. The concat sits on a
    # 128-lane boundary (should not materialize an extra VMEM copy).
    cat = jnp.concatenate([av.astype(bf16), emb.astype(bf16)], axis=-1)
    comb = jnp.maximum(
        jnp.dot(cat, wc_ref[...], preferred_element_type=f32)
        + bc_ref[...], 0.0)

    # Output head, zero-padded to 128 lanes (unmasked lane-dense bf16 store).
    out_ref[...] = (
        jnp.dot(comb.astype(bf16), wo_ref[...], preferred_element_type=f32)
        + bo_ref[...]).astype(out_ref.dtype)


def init_linear(key, in_f, out_f):
    """PyTorch-style init U(-1/sqrt(in), 1/sqrt(in)).

    Weight stored as (in, out) in bf16 (HBM half-width); bias (1, out) f32.
    """
    kw, kb = jax.random.split(key)
    bound = 1.0 / (in_f ** 0.5)
    w = jax.random.uniform(kw, (in_f, out_f), jnp.float32, -bound, bound)
    b = jax.random.uniform(kb, (1, out_f), jnp.float32, -bound, bound)
    return w.astype(jnp.bfloat16), b


def init_params(seed=0):
    keys = jax.random.split(jax.random.PRNGKey(seed), 5)
    wa, ba = init_linear(keys[0], AUDIO_DIM, BRANCH_DIM)   # audio_fc
    wv, bv = init_linear(keys[1], VIDEO_DIM, BRANCH_DIM)   # video_fc
    we, be = init_linear(keys[2], EMB_DIM, 128)            # embedding_fc
    wc, bc = init_linear(keys[3], CAT_DIM, HID)            # combined_fc
    wo, bo = init_linear(keys[4], HID, OUT_DIM)            # output
    return dict(wa=wa, ba=ba, wv=wv, bv=bv, we=we, be=be,
                wc=wc, bc=bc, wo=wo, bo=bo)


def pack_params(params):
    """One-time packing of kernel-ready operands (outside the hot path)."""
    bf16 = jnp.bfloat16
    f32 = jnp.float32

    # Block-diagonal fused audio|video weight, zero-padded to 64 rows so the
    # activation operand can be 64 columns (128-byte aligned HBM stride).
    w_av = jnp.zeros((AV_PAD, 2 * BRANCH_DIM), bf16)
    w_av = w_av.at[:AUDIO_DIM, :BRANCH_DIM].set(params["wa"])
    w_av = w_av.at[AUDIO_DIM:AV_DIM, BRANCH_DIM:].set(params["wv"])
    b_av = jnp.concatenate([params["ba"], params["bv"]], axis=1).astype(f32)

    # Lane-dense padded head: (128, 128) / (1, 128), cols >= 7 are zero.
    w_o = jnp.zeros((HID, OUT_PAD), bf16).at[:, :OUT_DIM].set(params["wo"])
    b_o = jnp.zeros((1, OUT_PAD), f32).at[:, :OUT_DIM].set(params["bo"])

    return dict(
        w_av=w_av, b_av=b_av,
        w_e=params["we"], b_e=params["be"].astype(f32),
        w_c=params["wc"], b_c=params["bc"].astype(f32),
        w_o=w_o, b_o=b_o,
    )


def _round_up(x, m):
    return ((x + m - 1) // m) * m


@jax.jit
def multimodal_forward(packed, audio_features, video_features, embeddings):
    B = audio_features.shape[0]
    f32 = jnp.float32

    # Glue: flatten NCHW video, fuse tiny audio/video inputs into one padded
    # 64-wide f32 operand (no bf16 cast pass here; kernel casts in VMEM).
    video_flat = video_features.reshape(B, -1)
    av_in = jnp.concatenate(
        [audio_features.astype(f32), video_flat.astype(f32),
         jnp.zeros((B, AV_PAD - AV_DIM), f32)], axis=1)          # (B, 64)

    # Batch tiling: >= 2 "parallel" grid steps whenever B > 8 so both v7x
    # TensorCores get work; TB <= 512 keeps the f32 emb tile (8 MiB) at
    # 16 MiB double-buffered, under the 32 MiB scoped VMEM limit everywhere.
    if B <= 8:
        TB = B
    else:
        TB = min(512, _round_up(pl.cdiv(B, 2), 8))
    grid = (pl.cdiv(B, TB),)

    def row_spec(d):
        return pl.BlockSpec((TB, d), lambda i: (i, 0))

    def const_spec(shape):
        # Weights/biases never change across grid steps -> single-buffered.
        return pl.BlockSpec(shape, lambda i: (0, 0),
                            pipeline_mode=pl.Buffered(1))

    flops = 2 * B * (AV_PAD * 2 * BRANCH_DIM + EMB_DIM * 128
                     + CAT_DIM * HID + HID * OUT_PAD)
    weight_bytes = 2 * (AV_PAD * 128 + EMB_DIM * 128 + CAT_DIM * HID
                        + HID * OUT_PAD) + 4 * (4 * 128)
    io_bytes = (B * AV_PAD * av_in.dtype.itemsize
                + B * EMB_DIM * embeddings.dtype.itemsize
                + B * OUT_PAD * 2)
    cost = pl.CostEstimate(flops=flops, transcendentals=0,
                           bytes_accessed=weight_bytes + io_bytes)

    out = pl.pallas_call(
        multimodal_kernel,
        out_shape=jax.ShapeDtypeStruct((B, OUT_PAD), jnp.bfloat16),
        grid=grid,
        in_specs=[
            row_spec(AV_PAD),                    # fused audio|video input
            row_spec(EMB_DIM),                   # embeddings (f32, cast in-kernel)
            const_spec(packed["w_av"].shape),
            const_spec(packed["b_av"].shape),
            const_spec(packed["w_e"].shape),
            const_spec(packed["b_e"].shape),
            const_spec(packed["w_c"].shape),
            const_spec(packed["b_c"].shape),
            const_spec(packed["w_o"].shape),
            const_spec(packed["b_o"].shape),
        ],
        out_specs=row_spec(OUT_PAD),
        compiler_params=pltpu.CompilerParams(
            dimension_semantics=("parallel",),
            vmem_limit_bytes=32 * 1024 * 1024),
        cost_estimate=cost,
    )(av_in, embeddings,
      packed["w_av"], packed["b_av"],
      packed["w_e"], packed["b_e"],
      packed["w_c"], packed["b_c"],
      packed["w_o"], packed["b_o"])
    # TODO(synk): if xprof on v7x shows exposed DMA, bump the embeddings
    # row_spec to pipeline_mode=pl.Buffered(3).

    return out[:, :OUT_DIM]


def reference_forward(params, audio_features, video_features, embeddings):
    """Pure-JAX f32 reference of the PyTorch forward (bf16-quantized weights)."""
    f32 = jnp.float32
    B = audio_features.shape[0]
    a = jax.nn.relu(audio_features @ params["wa"].astype(f32) + params["ba"])
    v = jax.nn.relu(video_features.reshape(B, -1) @ params["wv"].astype(f32)
                    + params["bv"])
    e = jax.nn.relu(embeddings @ params["we"].astype(f32) + params["be"])
    cat = jnp.concatenate([a, v, e], axis=1)
    c = jax.nn.relu(cat @ params["wc"].astype(f32) + params["bc"])
    return c @ params["wo"].astype(f32) + params["bo"]


if __name__ == "__main__":
    params = init_params(seed=0)
    packed = pack_params(params)

    def run_case(B, key):
        k_a, k_v, k_e = jax.random.split(key, 3)
        audio_features = jax.random.normal(k_a, (B, AUDIO_DIM), jnp.float32)
        video_features = jax.random.normal(k_v, (B, 1, 6, 6), jnp.float32)
        embeddings = jax.random.normal(k_e, (B, EMB_DIM), jnp.float32)

        out = multimodal_forward(packed, audio_features, video_features,
                                 embeddings)
        out = jax.block_until_ready(out)
        assert out.shape == (B, OUT_DIM), out.shape

        ref = reference_forward(params, audio_features, video_features,
                                embeddings)
        out_f32 = out.astype(jnp.float32)
        # bf16 weights/activations/output (f32 accumulation) -> loose tol.
        assert jnp.allclose(out_f32, ref, atol=5e-2, rtol=5e-2), (
            f"B={B}: kernel mismatch vs reference; max abs diff = "
            f"{float(jnp.max(jnp.abs(out_f32 - ref)))}")

    key = jax.random.PRNGKey(0)
    k_small, k_ragged = jax.random.split(key)
    run_case(2, k_small)    # tiny batch: single grid step
    run_case(20, k_ragged)  # TB=16 -> 2 parallel steps, ragged last tile (4 rows)

    print("KERNEL_OK")
</pallas_src>

<mosaic_0001>
module attributes {stable_mosaic.version = 11 : i64} {
  func.func @multimodal_kernel(%arg0: i32, %arg1: memref<2x64xf32, #tpu.memory_space<vmem>>, %arg2: memref<2x4096xf32, #tpu.memory_space<vmem>>, %arg3: memref<64x128xbf16, #tpu.memory_space<vmem>>, %arg4: memref<1x128xf32, #tpu.memory_space<vmem>>, %arg5: memref<4096x128xbf16, #tpu.memory_space<vmem>>, %arg6: memref<1x128xf32, #tpu.memory_space<vmem>>, %arg7: memref<256x128xbf16, #tpu.memory_space<vmem>>, %arg8: memref<1x128xf32, #tpu.memory_space<vmem>>, %arg9: memref<128x128xbf16, #tpu.memory_space<vmem>>, %arg10: memref<1x128xf32, #tpu.memory_space<vmem>>, %arg11: memref<2x128xbf16, #tpu.memory_space<vmem>>) attributes {dimension_semantics = [#tpu.dimension_semantics<parallel>], iteration_bounds = array<i64: 1>, scalar_prefetch = 0 : i64, scratch_operands = 0 : i64, tpu.core_type = #tpu.core_type<tc>, window_params = [{transform_indices = @transform_0, window_bounds = array<i64: 2, 64>}, {transform_indices = @transform_1, window_bounds = array<i64: 2, 4096>}, {pipeline_mode = #tpu.pipeline_mode<synchronous>, transform_indices = @transform_2, window_bounds = array<i64: 64, 128>}, {pipeline_mode = #tpu.pipeline_mode<synchronous>, transform_indices = @transform_3, window_bounds = array<i64: 1, 128>}, {pipeline_mode = #tpu.pipeline_mode<synchronous>, transform_indices = @transform_4, window_bounds = array<i64: 4096, 128>}, {pipeline_mode = #tpu.pipeline_mode<synchronous>, transform_indices = @transform_5, window_bounds = array<i64: 1, 128>}, {pipeline_mode = #tpu.pipeline_mode<synchronous>, transform_indices = @transform_6, window_bounds = array<i64: 256, 128>}, {pipeline_mode = #tpu.pipeline_mode<synchronous>, transform_indices = @transform_7, window_bounds = array<i64: 1, 128>}, {pipeline_mode = #tpu.pipeline_mode<synchronous>, transform_indices = @transform_8, window_bounds = array<i64: 128, 128>}, {pipeline_mode = #tpu.pipeline_mode<synchronous>, transform_indices = @transform_9, window_bounds = array<i64: 1, 128>}, {transform_indices = @transform_10, window_bounds = array<i64: 2, 128>}]} {
    %c0 = arith.constant 0 : index
    %c0_0 = arith.constant 0 : index
    %0 = vector.load %arg1[%c0, %c0_0] : memref<2x64xf32, #tpu.memory_space<vmem>>, vector<2x64xf32>
    %1 = arith.truncf %0 : vector<2x64xf32> to vector<2x64xbf16>
    %c0_1 = arith.constant 0 : index
    %c0_2 = arith.constant 0 : index
    %2 = vector.load %arg2[%c0_1, %c0_2] : memref<2x4096xf32, #tpu.memory_space<vmem>>, vector<2x4096xf32>
    %3 = arith.truncf %2 : vector<2x4096xf32> to vector<2x4096xbf16>
    %c0_3 = arith.constant 0 : index
    %c0_4 = arith.constant 0 : index
    %4 = vector.load %arg3[%c0_3, %c0_4] : memref<64x128xbf16, #tpu.memory_space<vmem>>, vector<64x128xbf16>
    %cst = arith.constant dense<0.000000e+00> : vector<2x128xf32>
    %5 = tpu.matmul %1, %4, %cst {dimension_numbers = #tpu.dot_dimension_numbers<[1], [0], [0], [1], [0, 0, 1, 1], [], []>} : vector<2x64xbf16>, vector<64x128xbf16>, vector<2x128xf32> -> vector<2x128xf32>
    %c0_5 = arith.constant 0 : index
    %c0_6 = arith.constant 0 : index
    %6 = vector.load %arg4[%c0_5, %c0_6] : memref<1x128xf32, #tpu.memory_space<vmem>>, vector<1x128xf32>
    %7 = vector.broadcast %6 : vector<1x128xf32> to vector<2x128xf32>
    %8 = arith.addf %5, %7 : vector<2x128xf32>
    %cst_7 = arith.constant 0.000000e+00 : f32
    %9 = vector.broadcast %cst_7 : f32 to vector<2x128xf32>
    %10 = arith.maximumf %8, %9 : vector<2x128xf32>
    %c0_8 = arith.constant 0 : index
    %c0_9 = arith.constant 0 : index
    %11 = vector.load %arg5[%c0_8, %c0_9] : memref<4096x128xbf16, #tpu.memory_space<vmem>>, vector<4096x128xbf16>
    %cst_10 = arith.constant dense<0.000000e+00> : vector<2x128xf32>
    %12 = tpu.matmul %3, %11, %cst_10 {dimension_numbers = #tpu.dot_dimension_numbers<[1], [0], [0], [1], [0, 0, 1, 1], [], []>} : vector<2x4096xbf16>, vector<4096x128xbf16>, vector<2x128xf32> -> vector<2x128xf32>
    %c0_11 = arith.constant 0 : index
    %c0_12 = arith.constant 0 : index
    %13 = vector.load %arg6[%c0_11, %c0_12] : memref<1x128xf32, #tpu.memory_space<vmem>>, vector<1x128xf32>
    %14 = vector.broadcast %13 : vector<1x128xf32> to vector<2x128xf32>
    %15 = arith.addf %12, %14 : vector<2x128xf32>
    %cst_13 = arith.constant 0.000000e+00 : f32
    %16 = vector.broadcast %cst_13 : f32 to vector<2x128xf32>
    %17 = arith.maximumf %15, %16 : vector<2x128xf32>
    %18 = arith.truncf %10 : vector<2x128xf32> to vector<2x128xbf16>
    %19 = arith.truncf %17 : vector<2x128xf32> to vector<2x128xbf16>
    %20 = tpu.concatenate %18, %19 in 1 : vector<2x128xbf16>, vector<2x128xbf16> -> vector<2x256xbf16>
    %c0_14 = arith.constant 0 : index
    %c0_15 = arith.constant 0 : index
    %21 = vector.load %arg7[%c0_14, %c0_15] : memref<256x128xbf16, #tpu.memory_space<vmem>>, vector<256x128xbf16>
    %cst_16 = arith.constant dense<0.000000e+00> : vector<2x128xf32>
    %22 = tpu.matmul %20, %21, %cst_16 {dimension_numbers = #tpu.dot_dimension_numbers<[1], [0], [0], [1], [0, 0, 1, 1], [], []>} : vector<2x256xbf16>, vector<256x128xbf16>, vector<2x128xf32> -> vector<2x128xf32>
    %c0_17 = arith.constant 0 : index
    %c0_18 = arith.constant 0 : index
    %23 = vector.load %arg8[%c0_17, %c0_18] : memref<1x128xf32, #tpu.memory_space<vmem>>, vector<1x128xf32>
    %24 = vector.broadcast %23 : vector<1x128xf32> to vector<2x128xf32>
    %25 = arith.addf %22, %24 : vector<2x128xf32>
    %cst_19 = arith.constant 0.000000e+00 : f32
    %26 = vector.broadcast %cst_19 : f32 to vector<2x128xf32>
    %27 = arith.maximumf %25, %26 : vector<2x128xf32>
    %28 = arith.truncf %27 : vector<2x128xf32> to vector<2x128xbf16>
    %c0_20 = arith.constant 0 : index
    %c0_21 = arith.constant 0 : index
    %29 = vector.load %arg9[%c0_20, %c0_21] : memref<128x128xbf16, #tpu.memory_space<vmem>>, vector<128x128xbf16>
    %cst_22 = arith.constant dense<0.000000e+00> : vector<2x128xf32>
    %30 = tpu.matmul %28, %29, %cst_22 {dimension_numbers = #tpu.dot_dimension_numbers<[1], [0], [0], [1], [0, 0, 1, 1], [], []>} : vector<2x128xbf16>, vector<128x128xbf16>, vector<2x128xf32> -> vector<2x128xf32>
    %c0_23 = arith.constant 0 : index
    %c0_24 = arith.constant 0 : index
    %31 = vector.load %arg10[%c0_23, %c0_24] : memref<1x128xf32, #tpu.memory_space<vmem>>, vector<1x128xf32>
    %32 = vector.broadcast %31 : vector<1x128xf32> to vector<2x128xf32>
    %33 = arith.addf %30, %32 : vector<2x128xf32>
    %34 = arith.truncf %33 : vector<2x128xf32> to vector<2x128xbf16>
    %c0_25 = arith.constant 0 : index
    %c0_26 = arith.constant 0 : index
    %35 = vector.load %arg11[%c0_25, %c0_26] : memref<2x128xbf16, #tpu.memory_space<vmem>>, vector<2x128xbf16>
    tpu.vector_store %arg11[%c0_25, %c0_26], %34 {strides = array<i32>} : memref<2x128xbf16, #tpu.memory_space<vmem>>, vector<2x128xbf16>,
    return
  }
  func.func @transform_0(%arg0: i32) -> (i32, i32) {
    %c0_i32 = arith.constant 0 : i32
    %c0_i32_0 = arith.constant 0 : i32
    return %arg0, %c0_i32 : i32, i32
  }
  func.func @transform_1(%arg0: i32) -> (i32, i32) {
    %c0_i32 = arith.constant 0 : i32
    %c0_i32_0 = arith.constant 0 : i32
    return %arg0, %c0_i32 : i32, i32
  }
  func.func @transform_2(%arg0: i32) -> (i32, i32) {
    %c0_i32 = arith.constant 0 : i32
    %c0_i32_0 = arith.constant 0 : i32
    %c0_i32_1 = arith.constant 0 : i32
    return %c0_i32, %c0_i32_0 : i32, i32
  }
  func.func @transform_3(%arg0: i32) -> (i32, i32) {
    %c0_i32 = arith.constant 0 : i32
    %c0_i32_0 = arith.constant 0 : i32
    %c0_i32_1 = arith.constant 0 : i32
    return %c0_i32, %c0_i32_0 : i32, i32
  }
  func.func @transform_4(%arg0: i32) -> (i32, i32) {
    %c0_i32 = arith.constant 0 : i32
    %c0_i32_0 = arith.constant 0 : i32
    %c0_i32_1 = arith.constant 0 : i32
    return %c0_i32, %c0_i32_0 : i32, i32
  }
  func.func @transform_5(%arg0: i32) -> (i32, i32) {
    %c0_i32 = arith.constant 0 : i32
    %c0_i32_0 = arith.constant 0 : i32
    %c0_i32_1 = arith.constant 0 : i32
    return %c0_i32, %c0_i32_0 : i32, i32
  }
  func.func @transform_6(%arg0: i32) -> (i32, i32) {
    %c0_i32 = arith.constant 0 : i32
    %c0_i32_0 = arith.constant 0 : i32
    %c0_i32_1 = arith.constant 0 : i32
    return %c0_i32, %c0_i32_0 : i32, i32
  }
  func.func @transform_7(%arg0: i32) -> (i32, i32) {
    %c0_i32 = arith.constant 0 : i32
    %c0_i32_0 = arith.constant 0 : i32
    %c0_i32_1 = arith.constant 0 : i32
    return %c0_i32, %c0_i32_0 : i32, i32
  }
  func.func @transform_8(%arg0: i32) -> (i32, i32) {
    %c0_i32 = arith.constant 0 : i32
    %c0_i32_0 = arith.constant 0 : i32
    %c0_i32_1 = arith.constant 0 : i32
    return %c0_i32, %c0_i32_0 : i32, i32
  }
  func.func @transform_9(%arg0: i32) -> (i32, i32) {
    %c0_i32 = arith.constant 0 : i32
    %c0_i32_0 = arith.constant 0 : i32
    %c0_i32_1 = arith.constant 0 : i32
    return %c0_i32, %c0_i32_0 : i32, i32
  }
  func.func @transform_10(%arg0: i32) -> (i32, i32) {
    %c0_i32 = arith.constant 0 : i32
    %c0_i32_0 = arith.constant 0 : i32
    return %arg0, %c0_i32 : i32, i32
  }
}

</mosaic_0001>

<llo_original>
// kernel: multimodal_forward.1
$region0: #{multimodal_forward.1}
  #allocation0 [shape = 'u32[]', space=smem, size = 0x4, offset = 0x4, fixed_abs, tag = 'smem constant byte address 0x4 - core index']
  #allocation1 [shape = 'u32[144,128]{1,0:T(1,128)}', space=vmem, size = 0x12000, scoped, tag = 'internal scratch']
  %s0 = inlined_call_operand.vmem [shape: f32[2,64], index: 0, kind: input, shape index: {}]
  %s1 = inlined_call_operand.vmem [shape: f32[2,4096], index: 1, kind: input, shape index: {}]
  %s2 = inlined_call_operand.hbm [shape: bf16[64,128], index: 2, kind: input, shape index: {}]
  %s3 = inlined_call_operand.vmem [shape: f32[1,128], index: 3, kind: input, shape index: {}]
  %s4 = inlined_call_operand.hbm [shape: bf16[4096,128], index: 4, kind: input, shape index: {}]
  %s5 = inlined_call_operand.hbm [shape: f32[1,128], index: 5, kind: input, shape index: {}]
  %s6 = inlined_call_operand.hbm [shape: bf16[256,128], index: 6, kind: input, shape index: {}]
  %s7 = inlined_call_operand.hbm [shape: f32[1,128], index: 7, kind: input, shape index: {}]
  %s8 = inlined_call_operand.hbm [shape: bf16[128,128], index: 8, kind: input, shape index: {}]
  %s9 = inlined_call_operand.hbm [shape: f32[1,128], index: 9, kind: input, shape index: {}]
  %s10 = inlined_call_operand.hbm [shape: bf16[2,128], index: 10, kind: output, shape index: {}]
  %s11 = sld [smem:[#allocation0]]
  $region78: #{multimodal_forward.1} parent=0
    _
  %s13 = ssub.s32 1, %s11
  %s14 = scalar_select 0, %s13, %s11
  $region1: #{multimodal_forward.1} parent=0
    #allocation2 [shape = 'u8[16384]{0}', space=vmem, size = 0x4000, scoped, tag = 'input window, operand 2, single buffered']
    #allocation3 [shape = 's32[1]{0}', space=sflag, size = 0x4, scoped, tag = 'scoped memory for multimodal_forward.1']
    #allocation4 [shape = 's32[1]{0}', space=sflag, size = 0x4, scoped, tag = 'scoped memory for multimodal_forward.1']
    #allocation5 [shape = 'u8[1048576]{0}', space=vmem, size = 0x100000, scoped, tag = 'input window, operand 4, single buffered']
    #allocation6 [shape = 's32[1]{0}', space=sflag, size = 0x4, scoped, tag = 'scoped memory for multimodal_forward.1']
    #allocation7 [shape = 'u8[512]{0}', space=vmem, size = 0x400, scoped, tag = 'input window, operand 5, single buffered']
    #allocation8 [shape = 'u8[65536]{0}', space=vmem, size = 0x10000, scoped, tag = 'input window, operand 6, single buffered']
    #allocation9 [shape = 's32[1]{0}', space=sflag, size = 0x4, scoped, tag = 'scoped memory for multimodal_forward.1']
    #allocation10 [shape = 'u8[512]{0}', space=vmem, size = 0x400, scoped, tag = 'input window, operand 7, single buffered']
    #allocation11 [shape = 'u8[32768]{0}', space=vmem, size = 0x8000, scoped, tag = 'input window, operand 8, single buffered']
    #allocation12 [shape = 's32[1]{0}', space=sflag, size = 0x4, scoped, tag = 'scoped memory for multimodal_forward.1']
    #allocation13 [shape = 'u8[512]{0}', space=vmem, size = 0x400, scoped, tag = 'input window, operand 9, single buffered']
    #allocation14 [shape = 'u8[512]{0}', space=vmem, size = 0x400, scoped, tag = 'output window, operand 0, single buffered']
    %15 = vsyncpa [#allocation3], 0
    %16 = vsyncpa [#allocation6], 0
    %17 = vsyncpa [#allocation9], 0
    %18 = vsyncpa [#allocation12], 0
    %19 = vsyncpa [#allocation4], 0
    // Predicated region
    $region2: #{multimodal_forward.1} parent=1 // pred_check
      _
    $region3: #{multimodal_forward.1} parent=1 // pred_check_branch
      %21 = sbr.rel (0) target = $region5
    $region4: #{multimodal_forward.1} parent=1 // pred_region
      _
    $region5: #{multimodal_forward.1} parent=1 // pred_fallthru
      _
    // Predicated region
    $region6: #{multimodal_forward.1} parent=1 // pred_check
      _
    $region7: #{multimodal_forward.1} parent=1 // pred_check_branch
      %23 = sbr.rel (0) target = $region9
    $region8: #{multimodal_forward.1} parent=1 // pred_region
      _
    $region9: #{multimodal_forward.1} parent=1 // pred_fallthru
      _
    // Predicated region
    $region10: #{multimodal_forward.1} parent=1 // pred_check
      _
    $region11: #{multimodal_forward.1} parent=1 // pred_check_branch
      %25 = sbr.rel (0) target = $region13
    $region12: #{multimodal_forward.1} parent=1 // pred_region
      %s27 = ssub.s32 512, 512
      %28 = vsyncadd [#allocation3], %s27
      %s29 = sshll.u32 [#allocation2], 4
      %s30 = int_to_ptr.vmem [resolvable:$true] %s29
      %35 = dma.hbm_to_vmem [thread:$0]  %s2, 512, %s30, [#allocation3], 64, 64, 4
    $region13: #{multimodal_forward.1} parent=1 // pred_fallthru
      _
    // Predicated region
    $region14: #{multimodal_forward.1} parent=1 // pred_check
      _
    $region15: #{multimodal_forward.1} parent=1 // pred_check_branch
      %37 = sbr.rel (0) target = $region17
    $region16: #{multimodal_forward.1} parent=1 // pred_region
      _
    $region17: #{multimodal_forward.1} parent=1 // pred_fallthru
      _
    // Predicated region
    $region18: #{multimodal_forward.1} parent=1 // pred_check
      _
    $region19: #{multimodal_forward.1} parent=1 // pred_check_branch
      %39 = sbr.rel (0) target = $region21
    $region20: #{multimodal_forward.1} parent=1 // pred_region
      %s41 = ssub.s32 32768, 32768
      %42 = vsyncadd [#allocation6], %s41
      %s43 = sshll.u32 [#allocation5], 4
      %s44 = int_to_ptr.vmem [resolvable:$true] %s43
      %49 = dma.hbm_to_vmem [thread:$0]  %s4, 32768, %s44, [#allocation6], 64, 64, 4
    $region21: #{multimodal_forward.1} parent=1 // pred_fallthru
      _
    // Predicated region
    $region22: #{multimodal_forward.1} parent=1 // pred_check
      _
    $region23: #{multimodal_forward.1} parent=1 // pred_check_branch
      %51 = sbr.rel (0) target = $region25
    $region24: #{multimodal_forward.1} parent=1 // pred_region
      %s53 = ssub.s32 16, 16
      %54 = vsyncadd [#allocation6], %s53
      %s56 = sshll.u32 [#allocation7], 4
      %s57 = int_to_ptr.vmem [resolvable:$true] %s56
      %59 = dma.hbm_to_vmem [thread:$0]  %s5, 16, %s57, [#allocation6]
    $region25: #{multimodal_forward.1} parent=1 // pred_fallthru
      _
    // Predicated region
    $region26: #{multimodal_forward.1} parent=1 // pred_check
      _
    $region27: #{multimodal_forward.1} parent=1 // pred_check_branch
      %61 = sbr.rel (0) target = $region29
    $region28: #{multimodal_forward.1} parent=1 // pred_region
      %s63 = ssub.s32 2048, 2048
      %64 = vsyncadd [#allocation9], %s63
      %s65 = sshll.u32 [#allocation8], 4
      %s66 = int_to_ptr.vmem [resolvable:$true] %s65
      %71 = dma.hbm_to_vmem [thread:$0]  %s6, 2048, %s66, [#allocation9], 64, 64, 4
    $region29: #{multimodal_forward.1} parent=1 // pred_fallthru
      _
    // Predicated region
    $region30: #{multimodal_forward.1} parent=1 // pred_check
      _
    $region31: #{multimodal_forward.1} parent=1 // pred_check_branch
      %73 = sbr.rel (0) target = $region33
    $region32: #{multimodal_forward.1} parent=1 // pred_region
      %s75 = ssub.s32 16, 16
      %76 = vsyncadd [#allocation9], %s75
      %s78 = sshll.u32 [#allocation10], 4
      %s79 = int_to_ptr.vmem [resolvable:$true] %s78
      %81 = dma.hbm_to_vmem [thread:$0]  %s7, 16, %s79, [#allocation9]
    $region33: #{multimodal_forward.1} parent=1 // pred_fallthru
      _
    // Predicated region
    $region34: #{multimodal_forward.1} parent=1 // pred_check
      _
    $region35: #{multimodal_forward.1} parent=1 // pred_check_branch
      %83 = sbr.rel (0) target = $region37
    $region36: #{multimodal_forward.1} parent=1 // pred_region
      %s85 = ssub.s32 1024, 1024
      %86 = vsyncadd [#allocation12], %s85
      %s87 = sshll.u32 [#allocation11], 4
      %s88 = int_to_ptr.vmem [resolvable:$true] %s87
      %93 = dma.hbm_to_vmem [thread:$0]  %s8, 1024, %s88, [#allocation12], 64, 64, 4
    $region37: #{multimodal_forward.1} parent=1 // pred_fallthru
      _
    // Predicated region
    $region38: #{multimodal_forward.1} parent=1 // pred_check
      _
    $region39: #{multimodal_forward.1} parent=1 // pred_check_branch
      %95 = sbr.rel (0) target = $region41
    $region40: #{multimodal_forward.1} parent=1 // pred_region
      %s97 = ssub.s32 16, 16
      %98 = vsyncadd [#allocation12], %s97
      %s100 = sshll.u32 [#allocation13], 4
      %s101 = int_to_ptr.vmem [resolvable:$true] %s100
      %103 = dma.hbm_to_vmem [thread:$0]  %s9, 16, %s101, [#allocation12]
    $region41: #{multimodal_forward.1} parent=1 // pred_fallthru
      _
    // Predicated region
    $region42: #{multimodal_forward.1} parent=1 // pred_check
      _
    $region43: #{multimodal_forward.1} parent=1 // pred_check_branch
      %105 = sbr.rel (0) target = $region45
    $region44: #{multimodal_forward.1} parent=1 // pred_region
      %106 = dma.done [#allocation3], 512
    $region45: #{multimodal_forward.1} parent=1 // pred_fallthru
      _
    // Predicated region
    $region46: #{multimodal_forward.1} parent=1 // pred_check
      _
    $region47: #{multimodal_forward.1} parent=1 // pred_check_branch
      %108 = sbr.rel (0) target = $region49
    $region48: #{multimodal_forward.1} parent=1 // pred_region
      %109 = dma.done [#allocation6], 32768
    $region49: #{multimodal_forward.1} parent=1 // pred_fallthru
      _
    // Predicated region
    $region50: #{multimodal_forward.1} parent=1 // pred_check
      _
    $region51: #{multimodal_forward.1} parent=1 // pred_check_branch
      %111 = sbr.rel (0) target = $region53
    $region52: #{multimodal_forward.1} parent=1 // pred_region
      %112 = dma.done [#allocation6], 16
    $region53: #{multimodal_forward.1} parent=1 // pred_fallthru
      _
    // Predicated region
    $region54: #{multimodal_forward.1} parent=1 // pred_check
      _
    $region55: #{multimodal_forward.1} parent=1 // pred_check_branch
      %114 = sbr.rel (0) target = $region57
    $region56: #{multimodal_forward.1} parent=1 // pred_region
      %115 = dma.done [#allocation9], 2048
    $region57: #{multimodal_forward.1} parent=1 // pred_fallthru
      _
    // Predicated region
    $region58: #{multimodal_forward.1} parent=1 // pred_check
      _
    $region59: #{multimodal_forward.1} parent=1 // pred_check_branch
      %117 = sbr.rel (0) target = $region61
    $region60: #{multimodal_forward.1} parent=1 // pred_region
      %118 = dma.done [#allocation9], 16
    $region61: #{multimodal_forward.1} parent=1 // pred_fallthru
      _
    // Predicated region
    $region62: #{multimodal_forward.1} parent=1 // pred_check
      _
    $region63: #{multimodal_forward.1} parent=1 // pred_check_branch
      %120 = sbr.rel (0) target = $region65
    $region64: #{multimodal_forward.1} parent=1 // pred_region
      %121 = dma.done [#allocation12], 1024
    $region65: #{multimodal_forward.1} parent=1 // pred_fallthru
      _
    // Predicated region
    $region66: #{multimodal_forward.1} parent=1 // pred_check
      _
    $region67: #{multimodal_forward.1} parent=1 // pred_check_branch
      %123 = sbr.rel (0) target = $region69
    $region68: #{multimodal_forward.1} parent=1 // pred_region
      %124 = dma.done [#allocation12], 16
    $region69: #{multimodal_forward.1} parent=1 // pred_fallthru
      _
    %v126 = vld [vmem:[%s0] sm:$0x3]
    %v127 = vpack.c.bf16 %v126, %v126
    %v128 = vld [vmem:[%s1] sm:$0xff]
    %v129 = vld [vmem:[%s1 + $0x8] sm:$0xff]
    %v130 = vld [vmem:[%s1 + $0x10] sm:$0xff]
    %v131 = vld [vmem:[%s1 + $0x18] sm:$0xff]
    %v132 = vld [vmem:[%s1 + $0x20] sm:$0xff]
    %v133 = vld [vmem:[%s1 + $0x28] sm:$0xff]
    %v134 = vld [vmem:[%s1 + $0x30] sm:$0xff]
    %v135 = vld [vmem:[%s1 + $0x38] sm:$0xff]
    %v144 = vcombine.high %v128, %v128
    %v146 = vunpack.c.l.s4 1983009808
    %v147 = vunpack.c.0.s8 %v146
    %v148 = vlaneseq
    %v149 = vshrl.u32 %v148, 7
    %v150 = vsub.s32 %v147, %v149
    %v151 = vrot.slane %v128, %v150
    %v153 = vunpack.c.l.s4 1983009808
    %v154 = vunpack.c.0.s8 %v153
    %v155 = vlaneseq
    %v156 = vshrl.u32 %v155, 7
    %v157 = vsub.s32 %v154, %v156
    %v158 = vrot.slane %v144, %v157
    %v159 = vcombine.high %v151, %v151
    %v160 = vcombine.high %v158, %v158
    %v161 = vcombine.high %v129, %v129
    %v163 = vunpack.c.l.s4 1983009808
    %v164 = vunpack.c.0.s8 %v163
    %v165 = vlaneseq
    %v166 = vshrl.u32 %v165, 7
    %v167 = vsub.s32 %v164, %v166
    %v168 = vrot.slane %v129, %v167
    %v170 = vunpack.c.l.s4 1983009808
    %v171 = vunpack.c.0.s8 %v170
    %v172 = vlaneseq
    %v173 = vshrl.u32 %v172, 7
    %v174 = vsub.s32 %v171, %v173
    %v175 = vrot.slane %v161, %v174
    %v176 = vcombine.high %v168, %v168
    %v177 = vcombine.high %v175, %v175
    %v178 = vcombine.high %v130, %v130
    %v180 = vunpack.c.l.s4 1983009808
    %v181 = vunpack.c.0.s8 %v180
    %v182 = vlaneseq
    %v183 = vshrl.u32 %v182, 7
    %v184 = vsub.s32 %v181, %v183
    %v185 = vrot.slane %v130, %v184
    %v187 = vunpack.c.l.s4 1983009808
    %v188 = vunpack.c.0.s8 %v187
    %v189 = vlaneseq
    %v190 = vshrl.u32 %v189, 7
    %v191 = vsub.s32 %v188, %v190
    %v192 = vrot.slane %v178, %v191
    %v193 = vcombine.high %v185, %v185
    %v194 = vcombine.high %v192, %v192
    %v195 = vcombine.high %v131, %v131
    %v197 = vunpack.c.l.s4 1983009808
    %v198 = vunpack.c.0.s8 %v197
    %v199 = vlaneseq
    %v200 = vshrl.u32 %v199, 7
    %v201 = vsub.s32 %v198, %v200
    %v202 = vrot.slane %v131, %v201
    %v204 = vunpack.c.l.s4 1983009808
    %v205 = vunpack.c.0.s8 %v204
    %v206 = vlaneseq
    %v207 = vshrl.u32 %v206, 7
    %v208 = vsub.s32 %v205, %v207
    %v209 = vrot.slane %v195, %v208
    %v210 = vcombine.high %v202, %v202
    %v211 = vcombine.high %v209, %v209
    %v212 = vcombine.high %v132, %v132
    %v214 = vunpack.c.l.s4 1983009808
    %v215 = vunpack.c.0.s8 %v214
    %v216 = vlaneseq
    %v217 = vshrl.u32 %v216, 7
    %v218 = vsub.s32 %v215, %v217
    %v219 = vrot.slane %v132, %v218
    %v221 = vunpack.c.l.s4 1983009808
    %v222 = vunpack.c.0.s8 %v221
    %v223 = vlaneseq
    %v224 = vshrl.u32 %v223, 7
    %v225 = vsub.s32 %v222, %v224
    %v226 = vrot.slane %v212, %v225
    %v227 = vcombine.high %v219, %v219
    %v228 = vcombine.high %v226, %v226
    %v229 = vcombine.high %v133, %v133
    %v231 = vunpack.c.l.s4 1983009808
    %v232 = vunpack.c.0.s8 %v231
    %v233 = vlaneseq
    %v234 = vshrl.u32 %v233, 7
    %v235 = vsub.s32 %v232, %v234
    %v236 = vrot.slane %v133, %v235
    %v238 = vunpack.c.l.s4 1983009808
    %v239 = vunpack.c.0.s8 %v238
    %v240 = vlaneseq
    %v241 = vshrl.u32 %v240, 7
    %v242 = vsub.s32 %v239, %v241
    %v243 = vrot.slane %v229, %v242
    %v244 = vcombine.high %v236, %v236
    %v245 = vcombine.high %v243, %v243
    %v246 = vcombine.high %v134, %v134
    %v248 = vunpack.c.l.s4 1983009808
    %v249 = vunpack.c.0.s8 %v248
    %v250 = vlaneseq
    %v251 = vshrl.u32 %v250, 7
    %v252 = vsub.s32 %v249, %v251
    %v253 = vrot.slane %v134, %v252
    %v255 = vunpack.c.l.s4 1983009808
    %v256 = vunpack.c.0.s8 %v255
    %v257 = vlaneseq
    %v258 = vshrl.u32 %v257, 7
    %v259 = vsub.s32 %v256, %v258
    %v260 = vrot.slane %v246, %v259
    %v261 = vcombine.high %v253, %v253
    %v262 = vcombine.high %v260, %v260
    %v263 = vcombine.high %v135, %v135
    %v265 = vunpack.c.l.s4 1983009808
    %v266 = vunpack.c.0.s8 %v265
    %v267 = vlaneseq
    %v268 = vshrl.u32 %v267, 7
    %v269 = vsub.s32 %v266, %v268
    %v270 = vrot.slane %v135, %v269
    %v272 = vunpack.c.l.s4 1983009808
    %v273 = vunpack.c.0.s8 %v272
    %v274 = vlaneseq
    %v275 = vshrl.u32 %v274, 7
    %v276 = vsub.s32 %v273, %v275
    %v277 = vrot.slane %v263, %v276
    %v278 = vcombine.high %v270, %v270
    %v279 = vcombine.high %v277, %v277
    %v312 = vpack.c.bf16 %v151, %v151
    %v313 = vpack.c.bf16 %v159, %v159
    %v314 = vpack.c.bf16 %v158, %v158
    %v315 = vpack.c.bf16 %v160, %v160
    %v316 = vpack.c.bf16 %v168, %v168
    %v317 = vpack.c.bf16 %v176, %v176
    %v318 = vpack.c.bf16 %v175, %v175
    %v319 = vpack.c.bf16 %v177, %v177
    %v320 = vpack.c.bf16 %v185, %v185
    %v321 = vpack.c.bf16 %v193, %v193
    %v322 = vpack.c.bf16 %v192, %v192
    %v323 = vpack.c.bf16 %v194, %v194
    %v324 = vpack.c.bf16 %v202, %v202
    %v325 = vpack.c.bf16 %v210, %v210
    %v326 = vpack.c.bf16 %v209, %v209
    %v327 = vpack.c.bf16 %v211, %v211
    %v328 = vpack.c.bf16 %v219, %v219
    %v329 = vpack.c.bf16 %v227, %v227
    %v330 = vpack.c.bf16 %v226, %v226
    %v331 = vpack.c.bf16 %v228, %v228
    %v332 = vpack.c.bf16 %v236, %v236
    %v333 = vpack.c.bf16 %v244, %v244
    %v334 = vpack.c.bf16 %v243, %v243
    %v335 = vpack.c.bf16 %v245, %v245
    %v336 = vpack.c.bf16 %v253, %v253
    %v337 = vpack.c.bf16 %v261, %v261
    %v338 = vpack.c.bf16 %v260, %v260
    %v339 = vpack.c.bf16 %v262, %v262
    %v340 = vpack.c.bf16 %v270, %v270
    %v341 = vpack.c.bf16 %v278, %v278
    %v342 = vpack.c.bf16 %v277, %v277
    %v343 = vpack.c.bf16 %v279, %v279
    %v344 = vld [vmem:[#allocation2] sm:$0xf]
    %v345 = vld [vmem:[#allocation2 + $0x4] sm:$0xf]
    %v346 = vld [vmem:[#allocation2 + $0x8] sm:$0xf]
    %v347 = vld [vmem:[#allocation2 + $0xc] sm:$0xf]
    %v348 = vld [vmem:[#allocation2 + $0x10] sm:$0xf]
    %v349 = vld [vmem:[#allocation2 + $0x14] sm:$0xf]
    %v350 = vld [vmem:[#allocation2 + $0x18] sm:$0xf]
    %v351 = vld [vmem:[#allocation2 + $0x1c] sm:$0xf]
    %v352 = vld [vmem:[%s3] sm:$0x1]
    %v354 = vlaneseq
    %v355 = vshrl.u32 %v354, 7
    %v356 = vsub.s32 0, %v355
    %v357 = vrot.slane %v352, %v356
    %v367 = vunpack.c.l.b16 %v344
    %v368 = vunpack.c.l.b16 %v345
    %v369 = vunpack.c.l.b16 %v346
    %v370 = vunpack.c.l.b16 %v347
    %v371 = vunpack.c.l.b16 %v348
    %v372 = vunpack.c.l.b16 %v349
    %v373 = vunpack.c.l.b16 %v350
    %v374 = vunpack.c.l.b16 %v351
    %v375 = vpack.c.b16 %v368, %v367
    %v376 = vpack.c.b16 %v370, %v369
    %v377 = vpack.c.b16 %v372, %v371
    %v378 = vpack.c.b16 %v374, %v373
    %vm383 = vcmask 523264
    %v385 = vsel %vm383, %v127, 0
    %387 = vmatprep.subr.bf16.mxu0 0
    %388 = vmatpush1.bf16.msra.mxu0 0
    %389 = vmatprep.subr.bf16.mxu0 0
    %390 = vmatpush1.bf16.msra.mxu0 0
    %391 = vmatprep.subr.bf16.mxu0 0
    %392 = vmatpush1.bf16.msra.mxu0 0
    %393 = vmatprep.subr.bf16.mxu0 0
    %394 = vmatpush1.bf16.msra.mxu0 0
    %395 = vmatprep.subr.bf16.mxu0 0
    %396 = vmatpush1.bf16.msra.mxu0 %v378
    %397 = vmatprep.subr.bf16.mxu0 0
    %398 = vmatpush1.bf16.msra.mxu0 %v377
    %399 = vmatprep.subr.bf16.mxu0 0
    %400 = vmatpush1.bf16.msra.mxu0 %v376
    %401 = vmatprep.subr.bf16.mxu0 0
    %402 = vmatpush1.bf16.msra.mxu0 %v375
    %403 = vmatprep.subr.bf16.mxu0 0
    %404 = vmatpush2.bf16.msra.mxu0 0
    %405 = vmatprep.subr.bf16.mxu0 0
    %406 = vmatpush2.bf16.msra.mxu0 0
    %407 = vmatprep.subr.bf16.mxu0 0
    %408 = vmatpush2.bf16.msra.mxu0 0
    %409 = vmatprep.subr.bf16.mxu0 0
    %410 = vmatpush2.bf16.msra.mxu0 0
    %411 = vmatprep.subr.bf16.mxu0 0
    %412 = vmatpush2.bf16.msra.mxu0 0
    %413 = vmatprep.subr.bf16.mxu0 0
    %414 = vmatpush2.bf16.msra.mxu0 0
    %415 = vmatprep.subr.bf16.mxu0 0
    %416 = vmatpush2.bf16.msra.mxu0 0
    %417 = vmatprep.subr.bf16.mxu0 0
    %418 = vmatpush2.bf16.msra.mxu0 0
    %419 = vmatprep.mubr.bf16.mxu0 0
    %420 = vmatmul.mubr.bf16.gmra.mxu0 %v385
    %v421 = vpop.f32.mrf.mxu0
    %v422 = vadd.f32 %v357, %v421
    %v423 = vpop.f32.mrf.mxu0
    %v424 = vpop.f32.mrf.mxu0
    %v425 = vpop.f32.mrf.mxu0
    %426 = vdwg.mxu0
    %v427 = vmax.f32 %v422, 0.0
    %v428 = vld [vmem:[#allocation5] sm:$0xf]
    %v429 = vld [vmem:[#allocation5 + $0x4] sm:$0xf]
    %v430 = vld [vmem:[#allocation5 + $0x8] sm:$0xf]
    %v431 = vld [vmem:[#allocation5 + $0xc] sm:$0xf]
    %v432 = vld [vmem:[#allocation5 + $0x10] sm:$0xf]
    %v433 = vld [vmem:[#allocation5 + $0x14] sm:$0xf]
    %v434 = vld [vmem:[#allocation5 + $0x18] sm:$0xf]
    %v435 = vld [vmem:[#allocation5 + $0x1c] sm:$0xf]
    %v436 = vld [vmem:[#allocation5 + $0x20] sm:$0xf]
    %v437 = vld [vmem:[#allocation5 + $0x24] sm:$0xf]
    %v438 = vld [vmem:[#allocation5 + $0x28] sm:$0xf]
    %v439 = vld [vmem:[#allocation5 + $0x2c] sm:$0xf]
    %v440 = vld [vmem:[#allocation5 + $0x30] sm:$0xf]
    %v441 = vld [vmem:[#allocation5 + $0x34] sm:$0xf]
    %v442 = vld [vmem:[#allocation5 + $0x38] sm:$0xf]
    %v443 = vld [vmem:[#allocation5 + $0x3c] sm:$0xf]
    %v444 = vld [vmem:[#allocation5 + $0x40] sm:$0xf]
    %v445 = vld [vmem:[#allocation5 + $0x44] sm:$0xf]
    %v446 = vld [vmem:[#allocation5 + $0x48] sm:$0xf]
    %v447 = vld [vmem:[#allocation5 + $0x4c] sm:$0xf]
    %v448 = vld [vmem:[#allocation5 + $0x50] sm:$0xf]
    %v449 = vld [vmem:[#allocation5 + $0x54] sm:$0xf]
    %v450 = vld [vmem:[#allocation5 + $0x58] sm:$0xf]
    %v451 = vld [vmem:[#allocation5 + $0x5c] sm:$0xf]
    %v452 = vld [vmem:[#allocation5 + $0x60] sm:$0xf]
    %v453 = vld [vmem:[#allocation5 + $0x64] sm:$0xf]
    %v454 = vld [vmem:[#allocation5 + $0x68] sm:$0xf]
    %v455 = vld [vmem:[#allocation5 + $0x6c] sm:$0xf]
    %v456 = vld [vmem:[#allocation5 + $0x70] sm:$0xf]
    %v457 = vld [vmem:[#allocation5 + $0x74] sm:$0xf]
    %v458 = vld [vmem:[#allocation5 + $0x78] sm:$0xf]
    %v459 = vld [vmem:[#allocation5 + $0x7c] sm:$0xf]
    %v460 = vld [vmem:[#allocation5 + $0x80] sm:$0xf]
    %v461 = vld [vmem:[#allocation5 + $0x84] sm:$0xf]
    %v462 = vld [vmem:[#allocation5 + $0x88] sm:$0xf]
    %v463 = vld [vmem:[#allocation5 + $0x8c] sm:$0xf]
    %v464 = vld [vmem:[#allocation5 + $0x90] sm:$0xf]
    %v465 = vld [vmem:[#allocation5 + $0x94] sm:$0xf]
    %v466 = vld [vmem:[#allocation5 + $0x98] sm:$0xf]
    %v467 = vld [vmem:[#allocation5 + $0x9c] sm:$0xf]
    %v468 = vld [vmem:[#allocation5 + $0xa0] sm:$0xf]
    %v469 = vld [vmem:[#allocation5 + $0xa4] sm:$0xf]
    %v470 = vld [vmem:[#allocation5 + $0xa8] sm:$0xf]
    %v471 = vld [vmem:[#allocation5 + $0xac] sm:$0xf]
    %v472 = vld [vmem:[#allocation5 + $0xb0] sm:$0xf]
    %v473 = vld [vmem:[#allocation5 + $0xb4] sm:$0xf]
    %v474 = vld [vmem:[#allocation5 + $0xb8] sm:$0xf]
    %v475 = vld [vmem:[#allocation5 + $0xbc] sm:$0xf]
    %v476 = vld [vmem:[#allocation5 + $0xc0] sm:$0xf]
    %v477 = vld [vmem:[#allocation5 + $0xc4] sm:$0xf]
    %v478 = vld [vmem:[#allocation5 + $0xc8] sm:$0xf]
    %v479 = vld [vmem:[#allocation5 + $0xcc] sm:$0xf]
    %v480 = vld [vmem:[#allocation5 + $0xd0] sm:$0xf]
    %v481 = vld [vmem:[#allocation5 + $0xd4] sm:$0xf]
    %v482 = vld [vmem:[#allocation5 + $0xd8] sm:$0xf]
    %v483 = vld [vmem:[#allocation5 + $0xdc] sm:$0xf]
    %v484 = vld [vmem:[#allocation5 + $0xe0] sm:$0xf]
    %v485 = vld [vmem:[#allocation5 + $0xe4] sm:$0xf]
    %v486 = vld [vmem:[#allocation5 + $0xe8] sm:$0xf]
    %v487 = vld [vmem:[#allocation5 + $0xec] sm:$0xf]
    %v488 = vld [vmem:[#allocation5 + $0xf0] sm:$0xf]
    %v489 = vld [vmem:[#allocation5 + $0xf4] sm:$0xf]
    %v490 = vld [vmem:[#allocation5 + $0xf8] sm:$0xf]
    %v491 = vld [vmem:[#allocation5 + $0xfc] sm:$0xf]
    %v492 = vld [vmem:[#allocation5 + $0x100] sm:$0xf]
    %v493 = vld [vmem:[#allocation5 + $0x104] sm:$0xf]
    %v494 = vld [vmem:[#allocation5 + $0x108] sm:$0xf]
    %v495 = vld [vmem:[#allocation5 + $0x10c] sm:$0xf]
    %v496 = vld [vmem:[#allocation5 + $0x110] sm:$0xf]
    %v497 = vld [vmem:[#allocation5 + $0x114] sm:$0xf]
    %v498 = vld [vmem:[#allocation5 + $0x118] sm:$0xf]
    %v499 = vld [vmem:[#allocation5 + $0x11c] sm:$0xf]
    %v500 = vld [vmem:[#allocation5 + $0x120] sm:$0xf]
    %v501 = vld [vmem:[#allocation5 + $0x124] sm:$0xf]
    %v502 = vld [vmem:[#allocation5 + $0x128] sm:$0xf]
    %v503 = vld [vmem:[#allocation5 + $0x12c] sm:$0xf]
    %v504 = vld [vmem:[#allocation5 + $0x130] sm:$0xf]
    %v505 = vld [vmem:[#allocation5 + $0x134] sm:$0xf]
    %v506 = vld [vmem:[#allocation5 + $0x138] sm:$0xf]
    %v507 = vld [vmem:[#allocation5 + $0x13c] sm:$0xf]
    %v508 = vld [vmem:[#allocation5 + $0x140] sm:$0xf]
    %v509 = vld [vmem:[#allocation5 + $0x144] sm:$0xf]
    %v510 = vld [vmem:[#allocation5 + $0x148] sm:$0xf]
    %v511 = vld [vmem:[#allocation5 + $0x14c] sm:$0xf]
    %v512 = vld [vmem:[#allocation5 + $0x150] sm:$0xf]
    %v513 = vld [vmem:[#allocation5 + $0x154] sm:$0xf]
    %v514 = vld [vmem:[#allocation5 + $0x158] sm:$0xf]
    %v515 = vld [vmem:[#allocation5 + $0x15c] sm:$0xf]
    %v516 = vld [vmem:[#allocation5 + $0x160] sm:$0xf]
    %v517 = vld [vmem:[#allocation5 + $0x164] sm:$0xf]
    %v518 = vld [vmem:[#allocation5 + $0x168] sm:$0xf]
    %v519 = vld [vmem:[#allocation5 + $0x16c] sm:$0xf]
    %v520 = vld [vmem:[#allocation5 + $0x170] sm:$0xf]
    %v521 = vld [vmem:[#allocation5 + $0x174] sm:$0xf]
    %v522 = vld [vmem:[#allocation5 + $0x178] sm:$0xf]
    %v523 = vld [vmem:[#allocation5 + $0x17c] sm:$0xf]
    %v524 = vld [vmem:[#allocation5 + $0x180] sm:$0xf]
    %v525 = vld [vmem:[#allocation5 + $0x184] sm:$0xf]
    %v526 = vld [vmem:[#allocation5 + $0x188] sm:$0xf]
    %v527 = vld [vmem:[#allocation5 + $0x18c] sm:$0xf]
    %v528 = vld [vmem:[#allocation5 + $0x190] sm:$0xf]
    %v529 = vld [vmem:[#allocation5 + $0x194] sm:$0xf]
    %v530 = vld [vmem:[#allocation5 + $0x198] sm:$0xf]
    %v531 = vld [vmem:[#allocation5 + $0x19c] sm:$0xf]
    %v532 = vld [vmem:[#allocation5 + $0x1a0] sm:$0xf]
    %v533 = vld [vmem:[#allocation5 + $0x1a4] sm:$0xf]
    %v534 = vld [vmem:[#allocation5 + $0x1a8] sm:$0xf]
    %v535 = vld [vmem:[#allocation5 + $0x1ac] sm:$0xf]
    %v536 = vld [vmem:[#allocation5 + $0x1b0] sm:$0xf]
    %v537 = vld [vmem:[#allocation5 + $0x1b4] sm:$0xf]
    %v538 = vld [vmem:[#allocation5 + $0x1b8] sm:$0xf]
    %v539 = vld [vmem:[#allocation5 + $0x1bc] sm:$0xf]
    %v540 = vld [vmem:[#allocation5 + $0x1c0] sm:$0xf]
    %v541 = vld [vmem:[#allocation5 + $0x1c4] sm:$0xf]
    %v542 = vld [vmem:[#allocation5 + $0x1c8] sm:$0xf]
    %v543 = vld [vmem:[#allocation5 + $0x1cc] sm:$0xf]
    %v544 = vld [vmem:[#allocation5 + $0x1d0] sm:$0xf]
    %v545 = vld [vmem:[#allocation5 + $0x1d4] sm:$0xf]
    %v546 = vld [vmem:[#allocation5 + $0x1d8] sm:$0xf]
    %v547 = vld [vmem:[#allocation5 + $0x1dc] sm:$0xf]
    %v548 = vld [vmem:[#allocation5 + $0x1e0] sm:$0xf]
    %v549 = vld [vmem:[#allocation5 + $0x1e4] sm:$0xf]
    %v550 = vld [vmem:[#allocation5 + $0x1e8] sm:$0xf]
    %v551 = vld [vmem:[#allocation5 + $0x1ec] sm:$0xf]
    %v552 = vld [vmem:[#allocation5 + $0x1f0] sm:$0xf]
    %v553 = vld [vmem:[#allocation5 + $0x1f4] sm:$0xf]
    %v554 = vld [vmem:[#allocation5 + $0x1f8] sm:$0xf]
    %v555 = vld [vmem:[#allocation5 + $0x1fc] sm:$0xf]
    %v556 = vld [vmem:[#allocation5 + $0x200] sm:$0xf]
    %v557 = vld [vmem:[#allocation5 + $0x204] sm:$0xf]
    %v558 = vld [vmem:[#allocation5 + $0x208] sm:$0xf]
    %v559 = vld [vmem:[#allocation5 + $0x20c] sm:$0xf]
    %v560 = vld [vmem:[#allocation5 + $0x210] sm:$0xf]
    %v561 = vld [vmem:[#allocation5 + $0x214] sm:$0xf]
    %v562 = vld [vmem:[#allocation5 + $0x218] sm:$0xf]
    %v563 = vld [vmem:[#allocation5 + $0x21c] sm:$0xf]
    %v564 = vld [vmem:[#allocation5 + $0x220] sm:$0xf]
    %v565 = vld [vmem:[#allocation5 + $0x224] sm:$0xf]
    %v566 = vld [vmem:[#allocation5 + $0x228] sm:$0xf]
    %v567 = vld [vmem:[#allocation5 + $0x22c] sm:$0xf]
    %v568 = vld [vmem:[#allocation5 + $0x230] sm:$0xf]
    %v569 = vld [vmem:[#allocation5 + $0x234] sm:$0xf]
    %v570 = vld [vmem:[#allocation5 + $0x238] sm:$0xf]
    %v571 = vld [vmem:[#allocation5 + $0x23c] sm:$0xf]
    %v572 = vld [vmem:[#allocation5 + $0x240] sm:$0xf]
    %v573 = vld [vmem:[#allocation5 + $0x244] sm:$0xf]
    %v574 = vld [vmem:[#allocation5 + $0x248] sm:$0xf]
    %v575 = vld [vmem:[#allocation5 + $0x24c] sm:$0xf]
    %v576 = vld [vmem:[#allocation5 + $0x250] sm:$0xf]
    %v577 = vld [vmem:[#allocation5 + $0x254] sm:$0xf]
    %v578 = vld [vmem:[#allocation5 + $0x258] sm:$0xf]
    %v579 = vld [vmem:[#allocation5 + $0x25c] sm:$0xf]
    %v580 = vld [vmem:[#allocation5 + $0x260] sm:$0xf]
    %v581 = vld [vmem:[#allocation5 + $0x264] sm:$0xf]
    %v582 = vld [vmem:[#allocation5 + $0x268] sm:$0xf]
    %v583 = vld [vmem:[#allocation5 + $0x26c] sm:$0xf]
    %v584 = vld [vmem:[#allocation5 + $0x270] sm:$0xf]
    %v585 = vld [vmem:[#allocation5 + $0x274] sm:$0xf]
    %v586 = vld [vmem:[#allocation5 + $0x278] sm:$0xf]
    %v587 = vld [vmem:[#allocation5 + $0x27c] sm:$0xf]
    %v588 = vld [vmem:[#allocation5 + $0x280] sm:$0xf]
    %v589 = vld [vmem:[#allocation5 + $0x284] sm:$0xf]
    %v590 = vld [vmem:[#allocation5 + $0x288] sm:$0xf]
    %v591 = vld [vmem:[#allocation5 + $0x28c] sm:$0xf]
    %v592 = vld [vmem:[#allocation5 + $0x290] sm:$0xf]
    %v593 = vld [vmem:[#allocation5 + $0x294] sm:$0xf]
    %v594 = vld [vmem:[#allocation5 + $0x298] sm:$0xf]
    %v595 = vld [vmem:[#allocation5 + $0x29c] sm:$0xf]
    %v596 = vld [vmem:[#allocation5 + $0x2a0] sm:$0xf]
    %v597 = vld [vmem:[#allocation5 + $0x2a4] sm:$0xf]
    %v598 = vld [vmem:[#allocation5 + $0x2a8] sm:$0xf]
    %v599 = vld [vmem:[#allocation5 + $0x2ac] sm:$0xf]
    %v600 = vld [vmem:[#allocation5 + $0x2b0] sm:$0xf]
    %v601 = vld [vmem:[#allocation5 + $0x2b4] sm:$0xf]
    %v602 = vld [vmem:[#allocation5 + $0x2b8] sm:$0xf]
    %v603 = vld [vmem:[#allocation5 + $0x2bc] sm:$0xf]
    %v604 = vld [vmem:[#allocation5 + $0x2c0] sm:$0xf]
    %v605 = vld [vmem:[#allocation5 + $0x2c4] sm:$0xf]
    %v606 = vld [vmem:[#allocation5 + $0x2c8] sm:$0xf]
    %v607 = vld [vmem:[#allocation5 + $0x2cc] sm:$0xf]
    %v608 = vld [vmem:[#allocation5 + $0x2d0] sm:$0xf]
    %v609 = vld [vmem:[#allocation5 + $0x2d4] sm:$0xf]
    %v610 = vld [vmem:[#allocation5 + $0x2d8] sm:$0xf]
    %v611 = vld [vmem:[#allocation5 + $0x2dc] sm:$0xf]
    %v612 = vld [vmem:[#allocation5 + $0x2e0] sm:$0xf]
    %v613 = vld [vmem:[#allocation5 + $0x2e4] sm:$0xf]
    %v614 = vld [vmem:[#allocation5 + $0x2e8] sm:$0xf]
    %v615 = vld [vmem:[#allocation5 + $0x2ec] sm:$0xf]
    %v616 = vld [vmem:[#allocation5 + $0x2f0] sm:$0xf]
    %v617 = vld [vmem:[#allocation5 + $0x2f4] sm:$0xf]
    %v618 = vld [vmem:[#allocation5 + $0x2f8] sm:$0xf]
    %v619 = vld [vmem:[#allocation5 + $0x2fc] sm:$0xf]
    %v620 = vld [vmem:[#allocation5 + $0x300] sm:$0xf]
    %v621 = vld [vmem:[#allocation5 + $0x304] sm:$0xf]
    %v622 = vld [vmem:[#allocation5 + $0x308] sm:$0xf]
    %v623 = vld [vmem:[#allocation5 + $0x30c] sm:$0xf]
    %v624 = vld [vmem:[#allocation5 + $0x310] sm:$0xf]
    %v625 = vld [vmem:[#allocation5 + $0x314] sm:$0xf]
    %v626 = vld [vmem:[#allocation5 + $0x318] sm:$0xf]
    %v627 = vld [vmem:[#allocation5 + $0x31c] sm:$0xf]
    %v628 = vld [vmem:[#allocation5 + $0x320] sm:$0xf]
    %v629 = vld [vmem:[#allocation5 + $0x324] sm:$0xf]
    %v630 = vld [vmem:[#allocation5 + $0x328] sm:$0xf]
    %v631 = vld [vmem:[#allocation5 + $0x32c] sm:$0xf]
    %v632 = vld [vmem:[#allocation5 + $0x330] sm:$0xf]
    %v633 = vld [vmem:[#allocation5 + $0x334] sm:$0xf]
    %v634 = vld [vmem:[#allocation5 + $0x338] sm:$0xf]
    %v635 = vld [vmem:[#allocation5 + $0x33c] sm:$0xf]
    %v636 = vld [vmem:[#allocation5 + $0x340] sm:$0xf]
    %v637 = vld [vmem:[#allocation5 + $0x344] sm:$0xf]
    %v638 = vld [vmem:[#allocation5 + $0x348] sm:$0xf]
    %v639 = vld [vmem:[#allocation5 + $0x34c] sm:$0xf]
    %v640 = vld [vmem:[#allocation5 + $0x350] sm:$0xf]
    %v641 = vld [vmem:[#allocation5 + $0x354] sm:$0xf]
    %v642 = vld [vmem:[#allocation5 + $0x358] sm:$0xf]
    %v643 = vld [vmem:[#allocation5 + $0x35c] sm:$0xf]
    %v644 = vld [vmem:[#allocation5 + $0x360] sm:$0xf]
    %v645 = vld [vmem:[#allocation5 + $0x364] sm:$0xf]
    %v646 = vld [vmem:[#allocation5 + $0x368] sm:$0xf]
    %v647 = vld [vmem:[#allocation5 + $0x36c] sm:$0xf]
    %v648 = vld [vmem:[#allocation5 + $0x370] sm:$0xf]
    %v649 = vld [vmem:[#allocation5 + $0x374] sm:$0xf]
    %v650 = vld [vmem:[#allocation5 + $0x378] sm:$0xf]
    %v651 = vld [vmem:[#allocation5 + $0x37c] sm:$0xf]
    %v652 = vld [vmem:[#allocation5 + $0x380] sm:$0xf]
    %v653 = vld [vmem:[#allocation5 + $0x384] sm:$0xf]
    %v654 = vld [vmem:[#allocation5 + $0x388] sm:$0xf]
    %v655 = vld [vmem:[#allocation5 + $0x38c] sm:$0xf]
    %v656 = vld [vmem:[#allocation5 + $0x390] sm:$0xf]
    %v657 = vld [vmem:[#allocation5 + $0x394] sm:$0xf]
    %v658 = vld [vmem:[#allocation5 + $0x398] sm:$0xf]
    %v659 = vld [vmem:[#allocation5 + $0x39c] sm:$0xf]
    %v660 = vld [vmem:[#allocation5 + $0x3a0] sm:$0xf]
    %v661 = vld [vmem:[#allocation5 + $0x3a4] sm:$0xf]
    %v662 = vld [vmem:[#allocation5 + $0x3a8] sm:$0xf]
    %v663 = vld [vmem:[#allocation5 + $0x3ac] sm:$0xf]
    %v664 = vld [vmem:[#allocation5 + $0x3b0] sm:$0xf]
    %v665 = vld [vmem:[#allocation5 + $0x3b4] sm:$0xf]
    %v666 = vld [vmem:[#allocation5 + $0x3b8] sm:$0xf]
    %v667 = vld [vmem:[#allocation5 + $0x3bc] sm:$0xf]
    %v668 = vld [vmem:[#allocation5 + $0x3c0] sm:$0xf]
    %v669 = vld [vmem:[#allocation5 + $0x3c4] sm:$0xf]
    %v670 = vld [vmem:[#allocation5 + $0x3c8] sm:$0xf]
    %v671 = vld [vmem:[#allocation5 + $0x3cc] sm:$0xf]
    %v672 = vld [vmem:[#allocation5 + $0x3d0] sm:$0xf]
    %v673 = vld [vmem:[#allocation5 + $0x3d4] sm:$0xf]
    %v674 = vld [vmem:[#allocation5 + $0x3d8] sm:$0xf]
    %v675 = vld [vmem:[#allocation5 + $0x3dc] sm:$0xf]
    %v676 = vld [vmem:[#allocation5 + $0x3e0] sm:$0xf]
    %v677 = vld [vmem:[#allocation5 + $0x3e4] sm:$0xf]
    %v678 = vld [vmem:[#allocation5 + $0x3e8] sm:$0xf]
    %v679 = vld [vmem:[#allocation5 + $0x3ec] sm:$0xf]
    %v680 = vld [vmem:[#allocation5 + $0x3f0] sm:$0xf]
    %v681 = vld [vmem:[#allocation5 + $0x3f4] sm:$0xf]
    %v682 = vld [vmem:[#allocation5 + $0x3f8] sm:$0xf]
    %v683 = vld [vmem:[#allocation5 + $0x3fc] sm:$0xf]
    %v684 = vld [vmem:[#allocation5 + $0x400] sm:$0xf]
    %v685 = vld [vmem:[#allocation5 + $0x404] sm:$0xf]
    %v686 = vld [vmem:[#allocation5 + $0x408] sm:$0xf]
    %v687 = vld [vmem:[#allocation5 + $0x40c] sm:$0xf]
    %v688 = vld [vmem:[#allocation5 + $0x410] sm:$0xf]
    %v689 = vld [vmem:[#allocation5 + $0x414] sm:$0xf]
    %v690 = vld [vmem:[#allocation5 + $0x418] sm:$0xf]
    %v691 = vld [vmem:[#allocation5 + $0x41c] sm:$0xf]
    %v692 = vld [vmem:[#allocation5 + $0x420] sm:$0xf]
    %v693 = vld [vmem:[#allocation5 + $0x424] sm:$0xf]
    %v694 = vld [vmem:[#allocation5 + $0x428] sm:$0xf]
    %v695 = vld [vmem:[#allocation5 + $0x42c] sm:$0xf]
    %v696 = vld [vmem:[#allocation5 + $0x430] sm:$0xf]
    %v697 = vld [vmem:[#allocation5 + $0x434] sm:$0xf]
    %v698 = vld [vmem:[#allocation5 + $0x438] sm:$0xf]
    %v699 = vld [vmem:[#allocation5 + $0x43c] sm:$0xf]
    %v700 = vld [vmem:[#allocation5 + $0x440] sm:$0xf]
    %v701 = vld [vmem:[#allocation5 + $0x444] sm:$0xf]
    %v702 = vld [vmem:[#allocation5 + $0x448] sm:$0xf]
    %v703 = vld [vmem:[#allocation5 + $0x44c] sm:$0xf]
    %v704 = vld [vmem:[#allocation5 + $0x450] sm:$0xf]
    %v705 = vld [vmem:[#allocation5 + $0x454] sm:$0xf]
    %v706 = vld [vmem:[#allocation5 + $0x458] sm:$0xf]
    %v707 = vld [vmem:[#allocation5 + $0x45c] sm:$0xf]
    %v708 = vld [vmem:[#allocation5 + $0x460] sm:$0xf]
    %v709 = vld [vmem:[#allocation5 + $0x464] sm:$0xf]
    %v710 = vld [vmem:[#allocation5 + $0x468] sm:$0xf]
    %v711 = vld [vmem:[#allocation5 + $0x46c] sm:$0xf]
    %v712 = vld [vmem:[#allocation5 + $0x470] sm:$0xf]
    %v713 = vld [vmem:[#allocation5 + $0x474] sm:$0xf]
    %v714 = vld [vmem:[#allocation5 + $0x478] sm:$0xf]
    %v715 = vld [vmem:[#allocation5 + $0x47c] sm:$0xf]
    %v716 = vld [vmem:[#allocation5 + $0x480] sm:$0xf]
    %v717 = vld [vmem:[#allocation5 + $0x484] sm:$0xf]
    %v718 = vld [vmem:[#allocation5 + $0x488] sm:$0xf]
    %v719 = vld [vmem:[#allocation5 + $0x48c] sm:$0xf]
    %v720 = vld [vmem:[#allocation5 + $0x490] sm:$0xf]
    %v721 = vld [vmem:[#allocation5 + $0x494] sm:$0xf]
    %v722 = vld [vmem:[#allocation5 + $0x498] sm:$0xf]
    %v723 = vld [vmem:[#allocation5 + $0x49c] sm:$0xf]
    %v724 = vld [vmem:[#allocation5 + $0x4a0] sm:$0xf]
    %v725 = vld [vmem:[#allocation5 + $0x4a4] sm:$0xf]
    %v726 = vld [vmem:[#allocation5 + $0x4a8] sm:$0xf]
    %v727 = vld [vmem:[#allocation5 + $0x4ac] sm:$0xf]
    %v728 = vld [vmem:[#allocation5 + $0x4b0] sm:$0xf]
    %v729 = vld [vmem:[#allocation5 + $0x4b4] sm:$0xf]
    %v730 = vld [vmem:[#allocation5 + $0x4b8] sm:$0xf]
    %v731 = vld [vmem:[#allocation5 + $0x4bc] sm:$0xf]
    %v732 = vld [vmem:[#allocation5 + $0x4c0] sm:$0xf]
    %v733 = vld [vmem:[#allocation5 + $0x4c4] sm:$0xf]
    %v734 = vld [vmem:[#allocation5 + $0x4c8] sm:$0xf]
    %v735 = vld [vmem:[#allocation5 + $0x4cc] sm:$0xf]
    %v736 = vld [vmem:[#allocation5 + $0x4d0] sm:$0xf]
    %v737 = vld [vmem:[#allocation5 + $0x4d4] sm:$0xf]
    %v738 = vld [vmem:[#allocation5 + $0x4d8] sm:$0xf]
    %v739 = vld [vmem:[#allocation5 + $0x4dc] sm:$0xf]
    %v740 = vld [vmem:[#allocation5 + $0x4e0] sm:$0xf]
    %v741 = vld [vmem:[#allocation5 + $0x4e4] sm:$0xf]
    %v742 = vld [vmem:[#allocation5 + $0x4e8] sm:$0xf]
    %v743 = vld [vmem:[#allocation5 + $0x4ec] sm:$0xf]
    %v744 = vld [vmem:[#allocation5 + $0x4f0] sm:$0xf]
    %v745 = vld [vmem:[#allocation5 + $0x4f4] sm:$0xf]
    %v746 = vld [vmem:[#allocation5 + $0x4f8] sm:$0xf]
    %v747 = vld [vmem:[#allocation5 + $0x4fc] sm:$0xf]
    %v748 = vld [vmem:[#allocation5 + $0x500] sm:$0xf]
    %v749 = vld [vmem:[#allocation5 + $0x504] sm:$0xf]
    %v750 = vld [vmem:[#allocation5 + $0x508] sm:$0xf]
    %v751 = vld [vmem:[#allocation5 + $0x50c] sm:$0xf]
    %v752 = vld [vmem:[#allocation5 + $0x510] sm:$0xf]
    %v753 = vld [vmem:[#allocation5 + $0x514] sm:$0xf]
    %v754 = vld [vmem:[#allocation5 + $0x518] sm:$0xf]
    %v755 = vld [vmem:[#allocation5 + $0x51c] sm:$0xf]
    %v756 = vld [vmem:[#allocation5 + $0x520] sm:$0xf]
    %v757 = vld [vmem:[#allocation5 + $0x524] sm:$0xf]
    %v758 = vld [vmem:[#allocation5 + $0x528] sm:$0xf]
    %v759 = vld [vmem:[#allocation5 + $0x52c] sm:$0xf]
    %v760 = vld [vmem:[#allocation5 + $0x530] sm:$0xf]
    %v761 = vld [vmem:[#allocation5 + $0x534] sm:$0xf]
    %v762 = vld [vmem:[#allocation5 + $0x538] sm:$0xf]
    %v763 = vld [vmem:[#allocation5 + $0x53c] sm:$0xf]
    %v764 = vld [vmem:[#allocation5 + $0x540] sm:$0xf]
    %v765 = vld [vmem:[#allocation5 + $0x544] sm:$0xf]
    %v766 = vld [vmem:[#allocation5 + $0x548] sm:$0xf]
    %v767 = vld [vmem:[#allocation5 + $0x54c] sm:$0xf]
    %v768 = vld [vmem:[#allocation5 + $0x550] sm:$0xf]
    %v769 = vld [vmem:[#allocation5 + $0x554] sm:$0xf]
    %v770 = vld [vmem:[#allocation5 + $0x558] sm:$0xf]
    %v771 = vld [vmem:[#allocation5 + $0x55c] sm:$0xf]
    %v772 = vld [vmem:[#allocation5 + $0x560] sm:$0xf]
    %v773 = vld [vmem:[#allocation5 + $0x564] sm:$0xf]
    %v774 = vld [vmem:[#allocation5 + $0x568] sm:$0xf]
    %v775 = vld [vmem:[#allocation5 + $0x56c] sm:$0xf]
    %v776 = vld [vmem:[#allocation5 + $0x570] sm:$0xf]
    %v777 = vld [vmem:[#allocation5 + $0x574] sm:$0xf]
    %v778 = vld [vmem:[#allocation5 + $0x578] sm:$0xf]
    %v779 = vld [vmem:[#allocation5 + $0x57c] sm:$0xf]
    %v780 = vld [vmem:[#allocation5 + $0x580] sm:$0xf]
    %v781 = vld [vmem:[#allocation5 + $0x584] sm:$0xf]
    %v782 = vld [vmem:[#allocation5 + $0x588] sm:$0xf]
    %v783 = vld [vmem:[#allocation5 + $0x58c] sm:$0xf]
    %v784 = vld [vmem:[#allocation5 + $0x590] sm:$0xf]
    %v785 = vld [vmem:[#allocation5 + $0x594] sm:$0xf]
    %v786 = vld [vmem:[#allocation5 + $0x598] sm:$0xf]
    %v787 = vld [vmem:[#allocation5 + $0x59c] sm:$0xf]
    %v788 = vld [vmem:[#allocation5 + $0x5a0] sm:$0xf]
    %v789 = vld [vmem:[#allocation5 + $0x5a4] sm:$0xf]
    %v790 = vld [vmem:[#allocation5 + $0x5a8] sm:$0xf]
    %v791 = vld [vmem:[#allocation5 + $0x5ac] sm:$0xf]
    %v792 = vld [vmem:[#allocation5 + $0x5b0] sm:$0xf]
    %v793 = vld [vmem:[#allocation5 + $0x5b4] sm:$0xf]
    %v794 = vld [vmem:[#allocation5 + $0x5b8] sm:$0xf]
    %v795 = vld [vmem:[#allocation5 + $0x5bc] sm:$0xf]
    %v796 = vld [vmem:[#allocation5 + $0x5c0] sm:$0xf]
    %v797 = vld [vmem:[#allocation5 + $0x5c4] sm:$0xf]
    %v798 = vld [vmem:[#allocation5 + $0x5c8] sm:$0xf]
    %v799 = vld [vmem:[#allocation5 + $0x5cc] sm:$0xf]
    %v800 = vld [vmem:[#allocation5 + $0x5d0] sm:$0xf]
    %v801 = vld [vmem:[#allocation5 + $0x5d4] sm:$0xf]
    %v802 = vld [vmem:[#allocation5 + $0x5d8] sm:$0xf]
    %v803 = vld [vmem:[#allocation5 + $0x5dc] sm:$0xf]
    %v804 = vld [vmem:[#allocation5 + $0x5e0] sm:$0xf]
    %v805 = vld [vmem:[#allocation5 + $0x5e4] sm:$0xf]
    %v806 = vld [vmem:[#allocation5 + $0x5e8] sm:$0xf]
    %v807 = vld [vmem:[#allocation5 + $0x5ec] sm:$0xf]
    %v808 = vld [vmem:[#allocation5 + $0x5f0] sm:$0xf]
    %v809 = vld [vmem:[#allocation5 + $0x5f4] sm:$0xf]
    %v810 = vld [vmem:[#allocation5 + $0x5f8] sm:$0xf]
    %v811 = vld [vmem:[#allocation5 + $0x5fc] sm:$0xf]
    %v812 = vld [vmem:[#allocation5 + $0x600] sm:$0xf]
    %v813 = vld [vmem:[#allocation5 + $0x604] sm:$0xf]
    %v814 = vld [vmem:[#allocation5 + $0x608] sm:$0xf]
    %v815 = vld [vmem:[#allocation5 + $0x60c] sm:$0xf]
    %v816 = vld [vmem:[#allocation5 + $0x610] sm:$0xf]
    %v817 = vld [vmem:[#allocation5 + $0x614] sm:$0xf]
    %v818 = vld [vmem:[#allocation5 + $0x618] sm:$0xf]
    %v819 = vld [vmem:[#allocation5 + $0x61c] sm:$0xf]
    %v820 = vld [vmem:[#allocation5 + $0x620] sm:$0xf]
    %v821 = vld [vmem:[#allocation5 + $0x624] sm:$0xf]
    %v822 = vld [vmem:[#allocation5 + $0x628] sm:$0xf]
    %v823 = vld [vmem:[#allocation5 + $0x62c] sm:$0xf]
    %v824 = vld [vmem:[#allocation5 + $0x630] sm:$0xf]
    %v825 = vld [vmem:[#allocation5 + $0x634] sm:$0xf]
    %v826 = vld [vmem:[#allocation5 + $0x638] sm:$0xf]
    %v827 = vld [vmem:[#allocation5 + $0x63c] sm:$0xf]
    %v828 = vld [vmem:[#allocation5 + $0x640] sm:$0xf]
    %v829 = vld [vmem:[#allocation5 + $0x644] sm:$0xf]
    %v830 = vld [vmem:[#allocation5 + $0x648] sm:$0xf]
    %v831 = vld [vmem:[#allocation5 + $0x64c] sm:$0xf]
    %v832 = vld [vmem:[#allocation5 + $0x650] sm:$0xf]
    %v833 = vld [vmem:[#allocation5 + $0x654] sm:$0xf]
    %v834 = vld [vmem:[#allocation5 + $0x658] sm:$0xf]
    %v835 = vld [vmem:[#allocation5 + $0x65c] sm:$0xf]
    %v836 = vld [vmem:[#allocation5 + $0x660] sm:$0xf]
    %v837 = vld [vmem:[#allocation5 + $0x664] sm:$0xf]
    %v838 = vld [vmem:[#allocation5 + $0x668] sm:$0xf]
    %v839 = vld [vmem:[#allocation5 + $0x66c] sm:$0xf]
    %v840 = vld [vmem:[#allocation5 + $0x670] sm:$0xf]
    %v841 = vld [vmem:[#allocation5 + $0x674] sm:$0xf]
    %v842 = vld [vmem:[#allocation5 + $0x678] sm:$0xf]
    %v843 = vld [vmem:[#allocation5 + $0x67c] sm:$0xf]
    %v844 = vld [vmem:[#allocation5 + $0x680] sm:$0xf]
    %v845 = vld [vmem:[#allocation5 + $0x684] sm:$0xf]
    %v846 = vld [vmem:[#allocation5 + $0x688] sm:$0xf]
    %v847 = vld [vmem:[#allocation5 + $0x68c] sm:$0xf]
    %v848 = vld [vmem:[#allocation5 + $0x690] sm:$0xf]
    %v849 = vld [vmem:[#allocation5 + $0x694] sm:$0xf]
    %v850 = vld [vmem:[#allocation5 + $0x698] sm:$0xf]
    %v851 = vld [vmem:[#allocation5 + $0x69c] sm:$0xf]
    %v852 = vld [vmem:[#allocation5 + $0x6a0] sm:$0xf]
    %v853 = vld [vmem:[#allocation5 + $0x6a4] sm:$0xf]
    %v854 = vld [vmem:[#allocation5 + $0x6a8] sm:$0xf]
    %v855 = vld [vmem:[#allocation5 + $0x6ac] sm:$0xf]
    %v856 = vld [vmem:[#allocation5 + $0x6b0] sm:$0xf]
    %v857 = vld [vmem:[#allocation5 + $0x6b4] sm:$0xf]
    %v858 = vld [vmem:[#allocation5 + $0x6b8] sm:$0xf]
    %v859 = vld [vmem:[#allocation5 + $0x6bc] sm:$0xf]
    %v860 = vld [vmem:[#allocation5 + $0x6c0] sm:$0xf]
    %v861 = vld [vmem:[#allocation5 + $0x6c4] sm:$0xf]
    %v862 = vld [vmem:[#allocation5 + $0x6c8] sm:$0xf]
    %v863 = vld [vmem:[#allocation5 + $0x6cc] sm:$0xf]
    %v864 = vld [vmem:[#allocation5 + $0x6d0] sm:$0xf]
    %v865 = vld [vmem:[#allocation5 + $0x6d4] sm:$0xf]
    %v866 = vld [vmem:[#allocation5 + $0x6d8] sm:$0xf]
    %v867 = vld [vmem:[#allocation5 + $0x6dc] sm:$0xf]
    %v868 = vld [vmem:[#allocation5 + $0x6e0] sm:$0xf]
    %v869 = vld [vmem:[#allocation5 + $0x6e4] sm:$0xf]
    %v870 = vld [vmem:[#allocation5 + $0x6e8] sm:$0xf]
    %v871 = vld [vmem:[#allocation5 + $0x6ec] sm:$0xf]
    %v872 = vld [vmem:[#allocation5 + $0x6f0] sm:$0xf]
    %v873 = vld [vmem:[#allocation5 + $0x6f4] sm:$0xf]
    %v874 = vld [vmem:[#allocation5 + $0x6f8] sm:$0xf]
    %v875 = vld [vmem:[#allocation5 + $0x6fc] sm:$0xf]
    %v876 = vld [vmem:[#allocation5 + $0x700] sm:$0xf]
    %v877 = vld [vmem:[#allocation5 + $0x704] sm:$0xf]
    %v878 = vld [vmem:[#allocation5 + $0x708] sm:$0xf]
    %v879 = vld [vmem:[#allocation5 + $0x70c] sm:$0xf]
    %v880 = vld [vmem:[#allocation5 + $0x710] sm:$0xf]
    %v881 = vld [vmem:[#allocation5 + $0x714] sm:$0xf]
    %v882 = vld [vmem:[#allocation5 + $0x718] sm:$0xf]
    %v883 = vld [vmem:[#allocation5 + $0x71c] sm:$0xf]
    %v884 = vld [vmem:[#allocation5 + $0x720] sm:$0xf]
    %v885 = vld [vmem:[#allocation5 + $0x724] sm:$0xf]
    %v886 = vld [vmem:[#allocation5 + $0x728] sm:$0xf]
    %v887 = vld [vmem:[#allocation5 + $0x72c] sm:$0xf]
    %v888 = vld [vmem:[#allocation5 + $0x730] sm:$0xf]
    %v889 = vld [vmem:[#allocation5 + $0x734] sm:$0xf]
    %v890 = vld [vmem:[#allocation5 + $0x738] sm:$0xf]
    %v891 = vld [vmem:[#allocation5 + $0x73c] sm:$0xf]
    %v892 = vld [vmem:[#allocation5 + $0x740] sm:$0xf]
    %v893 = vld [vmem:[#allocation5 + $0x744] sm:$0xf]
    %v894 = vld [vmem:[#allocation5 + $0x748] sm:$0xf]
    %v895 = vld [vmem:[#allocation5 + $0x74c] sm:$0xf]
    %v896 = vld [vmem:[#allocation5 + $0x750] sm:$0xf]
    %v897 = vld [vmem:[#allocation5 + $0x754] sm:$0xf]
    %v898 = vld [vmem:[#allocation5 + $0x758] sm:$0xf]
    %v899 = vld [vmem:[#allocation5 + $0x75c] sm:$0xf]
    %v900 = vld [vmem:[#allocation5 + $0x760] sm:$0xf]
    %v901 = vld [vmem:[#allocation5 + $0x764] sm:$0xf]
    %v902 = vld [vmem:[#allocation5 + $0x768] sm:$0xf]
    %v903 = vld [vmem:[#allocation5 + $0x76c] sm:$0xf]
    %v904 = vld [vmem:[#allocation5 + $0x770] sm:$0xf]
    %v905 = vld [vmem:[#allocation5 + $0x774] sm:$0xf]
    %v906 = vld [vmem:[#allocation5 + $0x778] sm:$0xf]
    %v907 = vld [vmem:[#allocation5 + $0x77c] sm:$0xf]
    %v908 = vld [vmem:[#allocation5 + $0x780] sm:$0xf]
    %v909 = vld [vmem:[#allocation5 + $0x784] sm:$0xf]
    %v910 = vld [vmem:[#allocation5 + $0x788] sm:$0xf]
    %v911 = vld [vmem:[#allocation5 + $0x78c] sm:$0xf]
    %v912 = vld [vmem:[#allocation5 + $0x790] sm:$0xf]
    %v913 = vld [vmem:[#allocation5 + $0x794] sm:$0xf]
    %v914 = vld [vmem:[#allocation5 + $0x798] sm:$0xf]
    %v915 = vld [vmem:[#allocation5 + $0x79c] sm:$0xf]
    %v916 = vld [vmem:[#allocation5 + $0x7a0] sm:$0xf]
    %v917 = vld [vmem:[#allocation5 + $0x7a4] sm:$0xf]
    %v918 = vld [vmem:[#allocation5 + $0x7a8] sm:$0xf]
    %v919 = vld [vmem:[#allocation5 + $0x7ac] sm:$0xf]
    %v920 = vld [vmem:[#allocation5 + $0x7b0] sm:$0xf]
    %v921 = vld [vmem:[#allocation5 + $0x7b4] sm:$0xf]
    %v922 = vld [vmem:[#allocation5 + $0x7b8] sm:$0xf]
    %v923 = vld [vmem:[#allocation5 + $0x7bc] sm:$0xf]
    %v924 = vld [vmem:[#allocation5 + $0x7c0] sm:$0xf]
    %v925 = vld [vmem:[#allocation5 + $0x7c4] sm:$0xf]
    %v926 = vld [vmem:[#allocation5 + $0x7c8] sm:$0xf]
    %v927 = vld [vmem:[#allocation5 + $0x7cc] sm:$0xf]
    %v928 = vld [vmem:[#allocation5 + $0x7d0] sm:$0xf]
    %v929 = vld [vmem:[#allocation5 + $0x7d4] sm:$0xf]
    %v930 = vld [vmem:[#allocation5 + $0x7d8] sm:$0xf]
    %v931 = vld [vmem:[#allocation5 + $0x7dc] sm:$0xf]
    %v932 = vld [vmem:[#allocation5 + $0x7e0] sm:$0xf]
    %v933 = vld [vmem:[#allocation5 + $0x7e4] sm:$0xf]
    %v934 = vld [vmem:[#allocation5 + $0x7e8] sm:$0xf]
    %v935 = vld [vmem:[#allocation5 + $0x7ec] sm:$0xf]
    %v936 = vld [vmem:[#allocation5 + $0x7f0] sm:$0xf]
    %v937 = vld [vmem:[#allocation5 + $0x7f4] sm:$0xf]
    %v938 = vld [vmem:[#allocation5 + $0x7f8] sm:$0xf]
    %v939 = vld [vmem:[#allocation5 + $0x7fc] sm:$0xf]
    %v940 = vld [vmem:[#allocation7] sm:$0x1]
    %v942 = vlaneseq
    %v943 = vshrl.u32 %v942, 7
    %v944 = vsub.s32 0, %v943
    %v945 = vrot.slane %v940, %v944
    %v1459 = vunpack.c.l.b16 %v428
    %v1460 = vunpack.c.l.b16 %v429
    %v1461 = vunpack.c.l.b16 %v430
    %v1462 = vunpack.c.l.b16 %v431
    %v1463 = vunpack.c.l.b16 %v432
    %v1464 = vunpack.c.l.b16 %v433
    %v1465 = vunpack.c.l.b16 %v434
    %v1466 = vunpack.c.l.b16 %v435
    %v1467 = vunpack.c.l.b16 %v436
    %v1468 = vunpack.c.l.b16 %v437
    %v1469 = vunpack.c.l.b16 %v438
    %v1470 = vunpack.c.l.b16 %v439
    %v1471 = vunpack.c.l.b16 %v440
    %v1472 = vunpack.c.l.b16 %v441
    %v1473 = vunpack.c.l.b16 %v442
    %v1474 = vunpack.c.l.b16 %v443
    %v1475 = vunpack.c.l.b16 %v444
    %v1476 = vunpack.c.l.b16 %v445
    %v1477 = vunpack.c.l.b16 %v446
    %v1478 = vunpack.c.l.b16 %v447
    %v1479 = vunpack.c.l.b16 %v448
    %v1480 = vunpack.c.l.b16 %v449
    %v1481 = vunpack.c.l.b16 %v450
    %v1482 = vunpack.c.l.b16 %v451
    %v1483 = vunpack.c.l.b16 %v452
    %v1484 = vunpack.c.l.b16 %v453
    %v1485 = vunpack.c.l.b16 %v454
    %v1486 = vunpack.c.l.b16 %v455
    %v1487 = vunpack.c.l.b16 %v456
    %v1488 = vunpack.c.l.b16 %v457
    %v1489 = vunpack.c.l.b16 %v458
    %v1490 = vunpack.c.l.b16 %v459
    %v1491 = vunpack.c.l.b16 %v460
    %v1492 = vunpack.c.l.b16 %v461
    %v1493 = vunpack.c.l.b16 %v462
    %v1494 = vunpack.c.l.b16 %v463
    %v1495 = vunpack.c.l.b16 %v464
    %v1496 = vunpack.c.l.b16 %v465
    %v1497 = vunpack.c.l.b16 %v466
    %v1498 = vunpack.c.l.b16 %v467
    %v1499 = vunpack.c.l.b16 %v468
    %v1500 = vunpack.c.l.b16 %v469
    %v1501 = vunpack.c.l.b16 %v470
    %v1502 = vunpack.c.l.b16 %v471
    %v1503 = vunpack.c.l.b16 %v472
    %v1504 = vunpack.c.l.b16 %v473
    %v1505 = vunpack.c.l.b16 %v474
    %v1506 = vunpack.c.l.b16 %v475
    %v1507 = vunpack.c.l.b16 %v476
    %v1508 = vunpack.c.l.b16 %v477
    %v1509 = vunpack.c.l.b16 %v478
    %v1510 = vunpack.c.l.b16 %v479
    %v1511 = vunpack.c.l.b16 %v480
    %v1512 = vunpack.c.l.b16 %v481
    %v1513 = vunpack.c.l.b16 %v482
    %v1514 = vunpack.c.l.b16 %v483
    %v1515 = vunpack.c.l.b16 %v484
    %v1516 = vunpack.c.l.b16 %v485
    %v1517 = vunpack.c.l.b16 %v486
    %v1518 = vunpack.c.l.b16 %v487
    %v1519 = vunpack.c.l.b16 %v488
    %v1520 = vunpack.c.l.b16 %v489
    %v1521 = vunpack.c.l.b16 %v490
    %v1522 = vunpack.c.l.b16 %v491
    %v1523 = vunpack.c.l.b16 %v492
    %v1524 = vunpack.c.l.b16 %v493
    %v1525 = vunpack.c.l.b16 %v494
    %v1526 = vunpack.c.l.b16 %v495
    %v1527 = vunpack.c.l.b16 %v496
    %v1528 = vunpack.c.l.b16 %v497
    %v1529 = vunpack.c.l.b16 %v498
    %v1530 = vunpack.c.l.b16 %v499
    %v1531 = vunpack.c.l.b16 %v500
    %v1532 = vunpack.c.l.b16 %v501
    %v1533 = vunpack.c.l.b16 %v502
    %v1534 = vunpack.c.l.b16 %v503
    %v1535 = vunpack.c.l.b16 %v504
    %v1536 = vunpack.c.l.b16 %v505
    %v1537 = vunpack.c.l.b16 %v506
    %v1538 = vunpack.c.l.b16 %v507
    %v1539 = vunpack.c.l.b16 %v508
    %v1540 = vunpack.c.l.b16 %v509
    %v1541 = vunpack.c.l.b16 %v510
    %v1542 = vunpack.c.l.b16 %v511
    %v1543 = vunpack.c.l.b16 %v512
    %v1544 = vunpack.c.l.b16 %v513
    %v1545 = vunpack.c.l.b16 %v514
    %v1546 = vunpack.c.l.b16 %v515
    %v1547 = vunpack.c.l.b16 %v516
    %v1548 = vunpack.c.l.b16 %v517
    %v1549 = vunpack.c.l.b16 %v518
    %v1550 = vunpack.c.l.b16 %v519
    %v1551 = vunpack.c.l.b16 %v520
    %v1552 = vunpack.c.l.b16 %v521
    %v1553 = vunpack.c.l.b16 %v522
    %v1554 = vunpack.c.l.b16 %v523
    %v1555 = vunpack.c.l.b16 %v524
    %v1556 = vunpack.c.l.b16 %v525
    %v1557 = vunpack.c.l.b16 %v526
    %v1558 = vunpack.c.l.b16 %v527
    %v1559 = vunpack.c.l.b16 %v528
    %v1560 = vunpack.c.l.b16 %v529
    %v1561 = vunpack.c.l.b16 %v530
    %v1562 = vunpack.c.l.b16 %v531
    %v1563 = vunpack.c.l.b16 %v532
    %v1564 = vunpack.c.l.b16 %v533
    %v1565 = vunpack.c.l.b16 %v534
    %v1566 = vunpack.c.l.b16 %v535
    %v1567 = vunpack.c.l.b16 %v536
    %v1568 = vunpack.c.l.b16 %v537
    %v1569 = vunpack.c.l.b16 %v538
    %v1570 = vunpack.c.l.b16 %v539
    %v1571 = vunpack.c.l.b16 %v540
    %v1572 = vunpack.c.l.b16 %v541
    %v1573 = vunpack.c.l.b16 %v542
    %v1574 = vunpack.c.l.b16 %v543
    %v1575 = vunpack.c.l.b16 %v544
    %v1576 = vunpack.c.l.b16 %v545
    %v1577 = vunpack.c.l.b16 %v546
    %v1578 = vunpack.c.l.b16 %v547
    %v1579 = vunpack.c.l.b16 %v548
    %v1580 = vunpack.c.l.b16 %v549
    %v1581 = vunpack.c.l.b16 %v550
    %v1582 = vunpack.c.l.b16 %v551
    %v1583 = vunpack.c.l.b16 %v552
    %v1584 = vunpack.c.l.b16 %v553
    %v1585 = vunpack.c.l.b16 %v554
    %v1586 = vunpack.c.l.b16 %v555
    %v1587 = vunpack.c.l.b16 %v556
    %v1588 = vunpack.c.l.b16 %v557
    %v1589 = vunpack.c.l.b16 %v558
    %v1590 = vunpack.c.l.b16 %v559
    %v1591 = vunpack.c.l.b16 %v560
    %v1592 = vunpack.c.l.b16 %v561
    %v1593 = vunpack.c.l.b16 %v562
    %v1594 = vunpack.c.l.b16 %v563
    %v1595 = vunpack.c.l.b16 %v564
    %v1596 = vunpack.c.l.b16 %v565
    %v1597 = vunpack.c.l.b16 %v566
    %v1598 = vunpack.c.l.b16 %v567
    %v1599 = vunpack.c.l.b16 %v568
    %v1600 = vunpack.c.l.b16 %v569
    %v1601 = vunpack.c.l.b16 %v570
    %v1602 = vunpack.c.l.b16 %v571
    %v1603 = vunpack.c.l.b16 %v572
    %v1604 = vunpack.c.l.b16 %v573
    %v1605 = vunpack.c.l.b16 %v574
    %v1606 = vunpack.c.l.b16 %v575
    %v1607 = vunpack.c.l.b16 %v576
    %v1608 = vunpack.c.l.b16 %v577
    %v1609 = vunpack.c.l.b16 %v578
    %v1610 = vunpack.c.l.b16 %v579
    %v1611 = vunpack.c.l.b16 %v580
    %v1612 = vunpack.c.l.b16 %v581
    %v1613 = vunpack.c.l.b16 %v582
    %v1614 = vunpack.c.l.b16 %v583
    %v1615 = vunpack.c.l.b16 %v584
    %v1616 = vunpack.c.l.b16 %v585
    %v1617 = vunpack.c.l.b16 %v586
    %v1618 = vunpack.c.l.b16 %v587
    %v1619 = vunpack.c.l.b16 %v588
    %v1620 = vunpack.c.l.b16 %v589
    %v1621 = vunpack.c.l.b16 %v590
    %v1622 = vunpack.c.l.b16 %v591
    %v1623 = vunpack.c.l.b16 %v592
    %v1624 = vunpack.c.l.b16 %v593
    %v1625 = vunpack.c.l.b16 %v594
    %v1626 = vunpack.c.l.b16 %v595
    %v1627 = vunpack.c.l.b16 %v596
    %v1628 = vunpack.c.l.b16 %v597
    %v1629 = vunpack.c.l.b16 %v598
    %v1630 = vunpack.c.l.b16 %v599
    %v1631 = vunpack.c.l.b16 %v600
    %v1632 = vunpack.c.l.b16 %v601
    %v1633 = vunpack.c.l.b16 %v602
    %v1634 = vunpack.c.l.b16 %v603
    %v1635 = vunpack.c.l.b16 %v604
    %v1636 = vunpack.c.l.b16 %v605
    %v1637 = vunpack.c.l.b16 %v606
    %v1638 = vunpack.c.l.b16 %v607
    %v1639 = vunpack.c.l.b16 %v608
    %v1640 = vunpack.c.l.b16 %v609
    %v1641 = vunpack.c.l.b16 %v610
    %v1642 = vunpack.c.l.b16 %v611
    %v1643 = vunpack.c.l.b16 %v612
    %v1644 = vunpack.c.l.b16 %v613
    %v1645 = vunpack.c.l.b16 %v614
    %v1646 = vunpack.c.l.b16 %v615
    %v1647 = vunpack.c.l.b16 %v616
    %v1648 = vunpack.c.l.b16 %v617
    %v1649 = vunpack.c.l.b16 %v618
    %v1650 = vunpack.c.l.b16 %v619
    %v1651 = vunpack.c.l.b16 %v620
    %v1652 = vunpack.c.l.b16 %v621
    %v1653 = vunpack.c.l.b16 %v622
    %v1654 = vunpack.c.l.b16 %v623
    %v1655 = vunpack.c.l.b16 %v624
    %v1656 = vunpack.c.l.b16 %v625
    %v1657 = vunpack.c.l.b16 %v626
    %v1658 = vunpack.c.l.b16 %v627
    %v1659 = vunpack.c.l.b16 %v628
    %v1660 = vunpack.c.l.b16 %v629
    %v1661 = vunpack.c.l.b16 %v630
    %v1662 = vunpack.c.l.b16 %v631
    %v1663 = vunpack.c.l.b16 %v632
    %v1664 = vunpack.c.l.b16 %v633
    %v1665 = vunpack.c.l.b16 %v634
    %v1666 = vunpack.c.l.b16 %v635
    %v1667 = vunpack.c.l.b16 %v636
    %v1668 = vunpack.c.l.b16 %v637
    %v1669 = vunpack.c.l.b16 %v638
    %v1670 = vunpack.c.l.b16 %v639
    %v1671 = vunpack.c.l.b16 %v640
    %v1672 = vunpack.c.l.b16 %v641
    %v1673 = vunpack.c.l.b16 %v642
    %v1674 = vunpack.c.l.b16 %v643
    %v1675 = vunpack.c.l.b16 %v644
    %v1676 = vunpack.c.l.b16 %v645
    %v1677 = vunpack.c.l.b16 %v646
    %v1678 = vunpack.c.l.b16 %v647
    %v1679 = vunpack.c.l.b16 %v648
    %v1680 = vunpack.c.l.b16 %v649
    %v1681 = vunpack.c.l.b16 %v650
    %v1682 = vunpack.c.l.b16 %v651
    %v1683 = vunpack.c.l.b16 %v652
    %v1684 = vunpack.c.l.b16 %v653
    %v1685 = vunpack.c.l.b16 %v654
    %v1686 = vunpack.c.l.b16 %v655
    %v1687 = vunpack.c.l.b16 %v656
    %v1688 = vunpack.c.l.b16 %v657
    %v1689 = vunpack.c.l.b16 %v658
    %v1690 = vunpack.c.l.b16 %v659
    %v1691 = vunpack.c.l.b16 %v660
    %v1692 = vunpack.c.l.b16 %v661
    %v1693 = vunpack.c.l.b16 %v662
    %v1694 = vunpack.c.l.b16 %v663
    %v1695 = vunpack.c.l.b16 %v664
    %v1696 = vunpack.c.l.b16 %v665
    %v1697 = vunpack.c.l.b16 %v666
    %v1698 = vunpack.c.l.b16 %v667
    %v1699 = vunpack.c.l.b16 %v668
    %v1700 = vunpack.c.l.b16 %v669
    %v1701 = vunpack.c.l.b16 %v670
    %v1702 = vunpack.c.l.b16 %v671
    %v1703 = vunpack.c.l.b16 %v672
    %v1704 = vunpack.c.l.b16 %v673
    %v1705 = vunpack.c.l.b16 %v674
    %v1706 = vunpack.c.l.b16 %v675
    %v1707 = vunpack.c.l.b16 %v676
    %v1708 = vunpack.c.l.b16 %v677
    %v1709 = vunpack.c.l.b16 %v678
    %v1710 = vunpack.c.l.b16 %v679
    %v1711 = vunpack.c.l.b16 %v680
    %v1712 = vunpack.c.l.b16 %v681
    %v1713 = vunpack.c.l.b16 %v682
    %v1714 = vunpack.c.l.b16 %v683
    %v1715 = vunpack.c.l.b16 %v684
    %v1716 = vunpack.c.l.b16 %v685
    %v1717 = vunpack.c.l.b16 %v686
    %v1718 = vunpack.c.l.b16 %v687
    %v1719 = vunpack.c.l.b16 %v688
    %v1720 = vunpack.c.l.b16 %v689
    %v1721 = vunpack.c.l.b16 %v690
    %v1722 = vunpack.c.l.b16 %v691
    %v1723 = vunpack.c.l.b16 %v692
    %v1724 = vunpack.c.l.b16 %v693
    %v1725 = vunpack.c.l.b16 %v694
    %v1726 = vunpack.c.l.b16 %v695
    %v1727 = vunpack.c.l.b16 %v696
    %v1728 = vunpack.c.l.b16 %v697
    %v1729 = vunpack.c.l.b16 %v698
    %v1730 = vunpack.c.l.b16 %v699
    %v1731 = vunpack.c.l.b16 %v700
    %v1732 = vunpack.c.l.b16 %v701
    %v1733 = vunpack.c.l.b16 %v702
    %v1734 = vunpack.c.l.b16 %v703
    %v1735 = vunpack.c.l.b16 %v704
    %v1736 = vunpack.c.l.b16 %v705
    %v1737 = vunpack.c.l.b16 %v706
    %v1738 = vunpack.c.l.b16 %v707
    %v1739 = vunpack.c.l.b16 %v708
    %v1740 = vunpack.c.l.b16 %v709
    %v1741 = vunpack.c.l.b16 %v710
    %v1742 = vunpack.c.l.b16 %v711
    %v1743 = vunpack.c.l.b16 %v712
    %v1744 = vunpack.c.l.b16 %v713
    %v1745 = vunpack.c.l.b16 %v714
    %v1746 = vunpack.c.l.b16 %v715
    %v1747 = vunpack.c.l.b16 %v716
    %v1748 = vunpack.c.l.b16 %v717
    %v1749 = vunpack.c.l.b16 %v718
    %v1750 = vunpack.c.l.b16 %v719
    %v1751 = vunpack.c.l.b16 %v720
    %v1752 = vunpack.c.l.b16 %v721
    %v1753 = vunpack.c.l.b16 %v722
    %v1754 = vunpack.c.l.b16 %v723
    %v1755 = vunpack.c.l.b16 %v724
    %v1756 = vunpack.c.l.b16 %v725
    %v1757 = vunpack.c.l.b16 %v726
    %v1758 = vunpack.c.l.b16 %v727
    %v1759 = vunpack.c.l.b16 %v728
    %v1760 = vunpack.c.l.b16 %v729
    %v1761 = vunpack.c.l.b16 %v730
    %v1762 = vunpack.c.l.b16 %v731
    %v1763 = vunpack.c.l.b16 %v732
    %v1764 = vunpack.c.l.b16 %v733
    %v1765 = vunpack.c.l.b16 %v734
    %v1766 = vunpack.c.l.b16 %v735
    %v1767 = vunpack.c.l.b16 %v736
    %v1768 = vunpack.c.l.b16 %v737
    %v1769 = vunpack.c.l.b16 %v738
    %v1770 = vunpack.c.l.b16 %v739
    %v1771 = vunpack.c.l.b16 %v740
    %v1772 = vunpack.c.l.b16 %v741
    %v1773 = vunpack.c.l.b16 %v742
    %v1774 = vunpack.c.l.b16 %v743
    %v1775 = vunpack.c.l.b16 %v744
    %v1776 = vunpack.c.l.b16 %v745
    %v1777 = vunpack.c.l.b16 %v746
    %v1778 = vunpack.c.l.b16 %v747
    %v1779 = vunpack.c.l.b16 %v748
    %v1780 = vunpack.c.l.b16 %v749
    %v1781 = vunpack.c.l.b16 %v750
    %v1782 = vunpack.c.l.b16 %v751
    %v1783 = vunpack.c.l.b16 %v752
    %v1784 = vunpack.c.l.b16 %v753
    %v1785 = vunpack.c.l.b16 %v754
    %v1786 = vunpack.c.l.b16 %v755
    %v1787 = vunpack.c.l.b16 %v756
    %v1788 = vunpack.c.l.b16 %v757
    %v1789 = vunpack.c.l.b16 %v758
    %v1790 = vunpack.c.l.b16 %v759
    %v1791 = vunpack.c.l.b16 %v760
    %v1792 = vunpack.c.l.b16 %v761
    %v1793 = vunpack.c.l.b16 %v762
    %v1794 = vunpack.c.l.b16 %v763
    %v1795 = vunpack.c.l.b16 %v764
    %v1796 = vunpack.c.l.b16 %v765
    %v1797 = vunpack.c.l.b16 %v766
    %v1798 = vunpack.c.l.b16 %v767
    %v1799 = vunpack.c.l.b16 %v768
    %v1800 = vunpack.c.l.b16 %v769
    %v1801 = vunpack.c.l.b16 %v770
    %v1802 = vunpack.c.l.b16 %v771
    %v1803 = vunpack.c.l.b16 %v772
    %v1804 = vunpack.c.l.b16 %v773
    %v1805 = vunpack.c.l.b16 %v774
    %v1806 = vunpack.c.l.b16 %v775
    %v1807 = vunpack.c.l.b16 %v776
    %v1808 = vunpack.c.l.b16 %v777
    %v1809 = vunpack.c.l.b16 %v778
    %v1810 = vunpack.c.l.b16 %v779
    %v1811 = vunpack.c.l.b16 %v780
    %v1812 = vunpack.c.l.b16 %v781
    %v1813 = vunpack.c.l.b16 %v782
    %v1814 = vunpack.c.l.b16 %v783
    %v1815 = vunpack.c.l.b16 %v784
    %v1816 = vunpack.c.l.b16 %v785
    %v1817 = vunpack.c.l.b16 %v786
    %v1818 = vunpack.c.l.b16 %v787
    %v1819 = vunpack.c.l.b16 %v788
    %v1820 = vunpack.c.l.b16 %v789
    %v1821 = vunpack.c.l.b16 %v790
    %v1822 = vunpack.c.l.b16 %v791
    %v1823 = vunpack.c.l.b16 %v792
    %v1824 = vunpack.c.l.b16 %v793
    %v1825 = vunpack.c.l.b16 %v794
    %v1826 = vunpack.c.l.b16 %v795
    %v1827 = vunpack.c.l.b16 %v796
    %v1828 = vunpack.c.l.b16 %v797
    %v1829 = vunpack.c.l.b16 %v798
    %v1830 = vunpack.c.l.b16 %v799
    %v1831 = vunpack.c.l.b16 %v800
    %v1832 = vunpack.c.l.b16 %v801
    %v1833 = vunpack.c.l.b16 %v802
    %v1834 = vunpack.c.l.b16 %v803
    %v1835 = vunpack.c.l.b16 %v804
    %v1836 = vunpack.c.l.b16 %v805
    %v1837 = vunpack.c.l.b16 %v806
    %v1838 = vunpack.c.l.b16 %v807
    %v1839 = vunpack.c.l.b16 %v808
    %v1840 = vunpack.c.l.b16 %v809
    %v1841 = vunpack.c.l.b16 %v810
    %v1842 = vunpack.c.l.b16 %v811
    %v1843 = vunpack.c.l.b16 %v812
    %v1844 = vunpack.c.l.b16 %v813
    %v1845 = vunpack.c.l.b16 %v814
    %v1846 = vunpack.c.l.b16 %v815
    %v1847 = vunpack.c.l.b16 %v816
    %v1848 = vunpack.c.l.b16 %v817
    %v1849 = vunpack.c.l.b16 %v818
    %v1850 = vunpack.c.l.b16 %v819
    %v1851 = vunpack.c.l.b16 %v820
    %v1852 = vunpack.c.l.b16 %v821
    %v1853 = vunpack.c.l.b16 %v822
    %v1854 = vunpack.c.l.b16 %v823
    %v1855 = vunpack.c.l.b16 %v824
    %v1856 = vunpack.c.l.b16 %v825
    %v1857 = vunpack.c.l.b16 %v826
    %v1858 = vunpack.c.l.b16 %v827
    %v1859 = vunpack.c.l.b16 %v828
    %v1860 = vunpack.c.l.b16 %v829
    %v1861 = vunpack.c.l.b16 %v830
    %v1862 = vunpack.c.l.b16 %v831
    %v1863 = vunpack.c.l.b16 %v832
    %v1864 = vunpack.c.l.b16 %v833
    %v1865 = vunpack.c.l.b16 %v834
    %v1866 = vunpack.c.l.b16 %v835
    %v1867 = vunpack.c.l.b16 %v836
    %v1868 = vunpack.c.l.b16 %v837
    %v1869 = vunpack.c.l.b16 %v838
    %v1870 = vunpack.c.l.b16 %v839
    %v1871 = vunpack.c.l.b16 %v840
    %v1872 = vunpack.c.l.b16 %v841
    %v1873 = vunpack.c.l.b16 %v842
    %v1874 = vunpack.c.l.b16 %v843
    %v1875 = vunpack.c.l.b16 %v844
    %v1876 = vunpack.c.l.b16 %v845
    %v1877 = vunpack.c.l.b16 %v846
    %v1878 = vunpack.c.l.b16 %v847
    %v1879 = vunpack.c.l.b16 %v848
    %v1880 = vunpack.c.l.b16 %v849
    %v1881 = vunpack.c.l.b16 %v850
    %v1882 = vunpack.c.l.b16 %v851
    %v1883 = vunpack.c.l.b16 %v852
    %v1884 = vunpack.c.l.b16 %v853
    %v1885 = vunpack.c.l.b16 %v854
    %v1886 = vunpack.c.l.b16 %v855
    %v1887 = vunpack.c.l.b16 %v856
    %v1888 = vunpack.c.l.b16 %v857
    %v1889 = vunpack.c.l.b16 %v858
    %v1890 = vunpack.c.l.b16 %v859
    %v1891 = vunpack.c.l.b16 %v860
    %v1892 = vunpack.c.l.b16 %v861
    %v1893 = vunpack.c.l.b16 %v862
    %v1894 = vunpack.c.l.b16 %v863
    %v1895 = vunpack.c.l.b16 %v864
    %v1896 = vunpack.c.l.b16 %v865
    %v1897 = vunpack.c.l.b16 %v866
    %v1898 = vunpack.c.l.b16 %v867
    %v1899 = vunpack.c.l.b16 %v868
    %v1900 = vunpack.c.l.b16 %v869
    %v1901 = vunpack.c.l.b16 %v870
    %v1902 = vunpack.c.l.b16 %v871
    %v1903 = vunpack.c.l.b16 %v872
    %v1904 = vunpack.c.l.b16 %v873
    %v1905 = vunpack.c.l.b16 %v874
    %v1906 = vunpack.c.l.b16 %v875
    %v1907 = vunpack.c.l.b16 %v876
    %v1908 = vunpack.c.l.b16 %v877
    %v1909 = vunpack.c.l.b16 %v878
    %v1910 = vunpack.c.l.b16 %v879
    %v1911 = vunpack.c.l.b16 %v880
    %v1912 = vunpack.c.l.b16 %v881
    %v1913 = vunpack.c.l.b16 %v882
    %v1914 = vunpack.c.l.b16 %v883
    %v1915 = vunpack.c.l.b16 %v884
    %v1916 = vunpack.c.l.b16 %v885
    %v1917 = vunpack.c.l.b16 %v886
    %v1918 = vunpack.c.l.b16 %v887
    %v1919 = vunpack.c.l.b16 %v888
    %v1920 = vunpack.c.l.b16 %v889
    %v1921 = vunpack.c.l.b16 %v890
    %v1922 = vunpack.c.l.b16 %v891
    %v1923 = vunpack.c.l.b16 %v892
    %v1924 = vunpack.c.l.b16 %v893
    %v1925 = vunpack.c.l.b16 %v894
    %v1926 = vunpack.c.l.b16 %v895
    %v1927 = vunpack.c.l.b16 %v896
    %v1928 = vunpack.c.l.b16 %v897
    %v1929 = vunpack.c.l.b16 %v898
    %v1930 = vunpack.c.l.b16 %v899
    %v1931 = vunpack.c.l.b16 %v900
    %v1932 = vunpack.c.l.b16 %v901
    %v1933 = vunpack.c.l.b16 %v902
    %v1934 = vunpack.c.l.b16 %v903
    %v1935 = vunpack.c.l.b16 %v904
    %v1936 = vunpack.c.l.b16 %v905
    %v1937 = vunpack.c.l.b16 %v906
    %v1938 = vunpack.c.l.b16 %v907
    %v1939 = vunpack.c.l.b16 %v908
    %v1940 = vunpack.c.l.b16 %v909
    %v1941 = vunpack.c.l.b16 %v910
    %v1942 = vunpack.c.l.b16 %v911
    %v1943 = vunpack.c.l.b16 %v912
    %v1944 = vunpack.c.l.b16 %v913
    %v1945 = vunpack.c.l.b16 %v914
    %v1946 = vunpack.c.l.b16 %v915
    %v1947 = vunpack.c.l.b16 %v916
    %v1948 = vunpack.c.l.b16 %v917
    %v1949 = vunpack.c.l.b16 %v918
    %v1950 = vunpack.c.l.b16 %v919
    %v1951 = vunpack.c.l.b16 %v920
    %v1952 = vunpack.c.l.b16 %v921
    %v1953 = vunpack.c.l.b16 %v922
    %v1954 = vunpack.c.l.b16 %v923
    %v1955 = vunpack.c.l.b16 %v924
    %v1956 = vunpack.c.l.b16 %v925
    %v1957 = vunpack.c.l.b16 %v926
    %v1958 = vunpack.c.l.b16 %v927
    %v1959 = vunpack.c.l.b16 %v928
    %v1960 = vunpack.c.l.b16 %v929
    %v1961 = vunpack.c.l.b16 %v930
    %v1962 = vunpack.c.l.b16 %v931
    %v1963 = vunpack.c.l.b16 %v932
    %v1964 = vunpack.c.l.b16 %v933
    %v1965 = vunpack.c.l.b16 %v934
    %v1966 = vunpack.c.l.b16 %v935
    %v1967 = vunpack.c.l.b16 %v936
    %v1968 = vunpack.c.l.b16 %v937
    %v1969 = vunpack.c.l.b16 %v938
    %v1970 = vunpack.c.l.b16 %v939
    %v1971 = vpack.c.b16 %v1460, %v1459
    %v1972 = vpack.c.b16 %v1462, %v1461
    %v1973 = vpack.c.b16 %v1464, %v1463
    %v1974 = vpack.c.b16 %v1466, %v1465
    %v1975 = vpack.c.b16 %v1468, %v1467
    %v1976 = vpack.c.b16 %v1470, %v1469
    %v1977 = vpack.c.b16 %v1472, %v1471
    %v1978 = vpack.c.b16 %v1474, %v1473
    %v1979 = vpack.c.b16 %v1476, %v1475
    %v1980 = vpack.c.b16 %v1478, %v1477
    %v1981 = vpack.c.b16 %v1480, %v1479
    %v1982 = vpack.c.b16 %v1482, %v1481
    %v1983 = vpack.c.b16 %v1484, %v1483
    %v1984 = vpack.c.b16 %v1486, %v1485
    %v1985 = vpack.c.b16 %v1488, %v1487
    %v1986 = vpack.c.b16 %v1490, %v1489
    %v1987 = vpack.c.b16 %v1492, %v1491
    %v1988 = vpack.c.b16 %v1494, %v1493
    %v1989 = vpack.c.b16 %v1496, %v1495
    %v1990 = vpack.c.b16 %v1498, %v1497
    %v1991 = vpack.c.b16 %v1500, %v1499
    %v1992 = vpack.c.b16 %v1502, %v1501
    %v1993 = vpack.c.b16 %v1504, %v1503
    %v1994 = vpack.c.b16 %v1506, %v1505
    %v1995 = vpack.c.b16 %v1508, %v1507
    %v1996 = vpack.c.b16 %v1510, %v1509
    %v1997 = vpack.c.b16 %v1512, %v1511
    %v1998 = vpack.c.b16 %v1514, %v1513
    %v1999 = vpack.c.b16 %v1516, %v1515
    %v2000 = vpack.c.b16 %v1518, %v1517
    %v2001 = vpack.c.b16 %v1520, %v1519
    %v2002 = vpack.c.b16 %v1522, %v1521
    %v2003 = vpack.c.b16 %v1524, %v1523
    %v2004 = vpack.c.b16 %v1526, %v1525
    %v2005 = vpack.c.b16 %v1528, %v1527
    %v2006 = vpack.c.b16 %v1530, %v1529
    %v2007 = vpack.c.b16 %v1532, %v1531
    %v2008 = vpack.c.b16 %v1534, %v1533
    %v2009 = vpack.c.b16 %v1536, %v1535
    %v2010 = vpack.c.b16 %v1538, %v1537
    %v2011 = vpack.c.b16 %v1540, %v1539
    %v2012 = vpack.c.b16 %v1542, %v1541
    %v2013 = vpack.c.b16 %v1544, %v1543
    %v2014 = vpack.c.b16 %v1546, %v1545
    %v2015 = vpack.c.b16 %v1548, %v1547
    %v2016 = vpack.c.b16 %v1550, %v1549
    %v2017 = vpack.c.b16 %v1552, %v1551
    %v2018 = vpack.c.b16 %v1554, %v1553
    %v2019 = vpack.c.b16 %v1556, %v1555
    %v2020 = vpack.c.b16 %v1558, %v1557
    %v2021 = vpack.c.b16 %v1560, %v1559
    %v2022 = vpack.c.b16 %v1562, %v1561
    %v2023 = vpack.c.b16 %v1564, %v1563
    %v2024 = vpack.c.b16 %v1566, %v1565
    %v2025 = vpack.c.b16 %v1568, %v1567
    %v2026 = vpack.c.b16 %v1570, %v1569
    %v2027 = vpack.c.b16 %v1572, %v1571
    %v2028 = vpack.c.b16 %v1574, %v1573
    %v2029 = vpack.c.b16 %v1576, %v1575
    %v2030 = vpack.c.b16 %v1578, %v1577
    %v2031 = vpack.c.b16 %v1580, %v1579
    %v2032 = vpack.c.b16 %v1582, %v1581
    %v2033 = vpack.c.b16 %v1584, %v1583
    %v2034 = vpack.c.b16 %v1586, %v1585
    %v2035 = vpack.c.b16 %v1588, %v1587
    %v2036 = vpack.c.b16 %v1590, %v1589
    %v2037 = vpack.c.b16 %v1592, %v1591
    %v2038 = vpack.c.b16 %v1594, %v1593
    %v2039 = vpack.c.b16 %v1596, %v1595
    %v2040 = vpack.c.b16 %v1598, %v1597
    %v2041 = vpack.c.b16 %v1600, %v1599
    %v2042 = vpack.c.b16 %v1602, %v1601
    %v2043 = vpack.c.b16 %v1604, %v1603
    %v2044 = vpack.c.b16 %v1606, %v1605
    %v2045 = vpack.c.b16 %v1608, %v1607
    %v2046 = vpack.c.b16 %v1610, %v1609
    %v2047 = vpack.c.b16 %v1612, %v1611
    %v2048 = vpack.c.b16 %v1614, %v1613
    %v2049 = vpack.c.b16 %v1616, %v1615
    %v2050 = vpack.c.b16 %v1618, %v1617
    %v2051 = vpack.c.b16 %v1620, %v1619
    %v2052 = vpack.c.b16 %v1622, %v1621
    %v2053 = vpack.c.b16 %v1624, %v1623
    %v2054 = vpack.c.b16 %v1626, %v1625
    %v2055 = vpack.c.b16 %v1628, %v1627
    %v2056 = vpack.c.b16 %v1630, %v1629
    %v2057 = vpack.c.b16 %v1632, %v1631
    %v2058 = vpack.c.b16 %v1634, %v1633
    %v2059 = vpack.c.b16 %v1636, %v1635
    %v2060 = vpack.c.b16 %v1638, %v1637
    %v2061 = vpack.c.b16 %v1640, %v1639
    %v2062 = vpack.c.b16 %v1642, %v1641
    %v2063 = vpack.c.b16 %v1644, %v1643
    %v2064 = vpack.c.b16 %v1646, %v1645
    %v2065 = vpack.c.b16 %v1648, %v1647
    %v2066 = vpack.c.b16 %v1650, %v1649
    %v2067 = vpack.c.b16 %v1652, %v1651
    %v2068 = vpack.c.b16 %v1654, %v1653
    %v2069 = vpack.c.b16 %v1656, %v1655
    %v2070 = vpack.c.b16 %v1658, %v1657
    %v2071 = vpack.c.b16 %v1660, %v1659
    %v2072 = vpack.c.b16 %v1662, %v1661
    %v2073 = vpack.c.b16 %v1664, %v1663
    %v2074 = vpack.c.b16 %v1666, %v1665
    %v2075 = vpack.c.b16 %v1668, %v1667
    %v2076 = vpack.c.b16 %v1670, %v1669
    %v2077 = vpack.c.b16 %v1672, %v1671
    %v2078 = vpack.c.b16 %v1674, %v1673
    %v2079 = vpack.c.b16 %v1676, %v1675
    %v2080 = vpack.c.b16 %v1678, %v1677
    %v2081 = vpack.c.b16 %v1680, %v1679
    %v2082 = vpack.c.b16 %v1682, %v1681
    %v2083 = vpack.c.b16 %v1684, %v1683
    %v2084 = vpack.c.b16 %v1686, %v1685
    %v2085 = vpack.c.b16 %v1688, %v1687
    %v2086 = vpack.c.b16 %v1690, %v1689
    %v2087 = vpack.c.b16 %v1692, %v1691
    %v2088 = vpack.c.b16 %v1694, %v1693
    %v2089 = vpack.c.b16 %v1696, %v1695
    %v2090 = vpack.c.b16 %v1698, %v1697
    %v2091 = vpack.c.b16 %v1700, %v1699
    %v2092 = vpack.c.b16 %v1702, %v1701
    %v2093 = vpack.c.b16 %v1704, %v1703
    %v2094 = vpack.c.b16 %v1706, %v1705
    %v2095 = vpack.c.b16 %v1708, %v1707
    %v2096 = vpack.c.b16 %v1710, %v1709
    %v2097 = vpack.c.b16 %v1712, %v1711
    %v2098 = vpack.c.b16 %v1714, %v1713
    %v2099 = vpack.c.b16 %v1716, %v1715
    %v2100 = vpack.c.b16 %v1718, %v1717
    %v2101 = vpack.c.b16 %v1720, %v1719
    %v2102 = vpack.c.b16 %v1722, %v1721
    %v2103 = vpack.c.b16 %v1724, %v1723
    %v2104 = vpack.c.b16 %v1726, %v1725
    %v2105 = vpack.c.b16 %v1728, %v1727
    %v2106 = vpack.c.b16 %v1730, %v1729
    %v2107 = vpack.c.b16 %v1732, %v1731
    %v2108 = vpack.c.b16 %v1734, %v1733
    %v2109 = vpack.c.b16 %v1736, %v1735
    %v2110 = vpack.c.b16 %v1738, %v1737
    %v2111 = vpack.c.b16 %v1740, %v1739
    %v2112 = vpack.c.b16 %v1742, %v1741
    %v2113 = vpack.c.b16 %v1744, %v1743
    %v2114 = vpack.c.b16 %v1746, %v1745
    %v2115 = vpack.c.b16 %v1748, %v1747
    %v2116 = vpack.c.b16 %v1750, %v1749
    %v2117 = vpack.c.b16 %v1752, %v1751
    %v2118 = vpack.c.b16 %v1754, %v1753
    %v2119 = vpack.c.b16 %v1756, %v1755
    %v2120 = vpack.c.b16 %v1758, %v1757
    %v2121 = vpack.c.b16 %v1760, %v1759
    %v2122 = vpack.c.b16 %v1762, %v1761
    %v2123 = vpack.c.b16 %v1764, %v1763
    %v2124 = vpack.c.b16 %v1766, %v1765
    %v2125 = vpack.c.b16 %v1768, %v1767
    %v2126 = vpack.c.b16 %v1770, %v1769
    %v2127 = vpack.c.b16 %v1772, %v1771
    %v2128 = vpack.c.b16 %v1774, %v1773
    %v2129 = vpack.c.b16 %v1776, %v1775
    %v2130 = vpack.c.b16 %v1778, %v1777
    %v2131 = vpack.c.b16 %v1780, %v1779
    %v2132 = vpack.c.b16 %v1782, %v1781
    %v2133 = vpack.c.b16 %v1784, %v1783
    %v2134 = vpack.c.b16 %v1786, %v1785
    %v2135 = vpack.c.b16 %v1788, %v1787
    %v2136 = vpack.c.b16 %v1790, %v1789
    %v2137 = vpack.c.b16 %v1792, %v1791
    %v2138 = vpack.c.b16 %v1794, %v1793
    %v2139 = vpack.c.b16 %v1796, %v1795
    %v2140 = vpack.c.b16 %v1798, %v1797
    %v2141 = vpack.c.b16 %v1800, %v1799
    %v2142 = vpack.c.b16 %v1802, %v1801
    %v2143 = vpack.c.b16 %v1804, %v1803
    %v2144 = vpack.c.b16 %v1806, %v1805
    %v2145 = vpack.c.b16 %v1808, %v1807
    %v2146 = vpack.c.b16 %v1810, %v1809
    %v2147 = vpack.c.b16 %v1812, %v1811
    %v2148 = vpack.c.b16 %v1814, %v1813
    %v2149 = vpack.c.b16 %v1816, %v1815
    %v2150 = vpack.c.b16 %v1818, %v1817
    %v2151 = vpack.c.b16 %v1820, %v1819
    %v2152 = vpack.c.b16 %v1822, %v1821
    %v2153 = vpack.c.b16 %v1824, %v1823
    %v2154 = vpack.c.b16 %v1826, %v1825
    %v2155 = vpack.c.b16 %v1828, %v1827
    %v2156 = vpack.c.b16 %v1830, %v1829
    %v2157 = vpack.c.b16 %v1832, %v1831
    %v2158 = vpack.c.b16 %v1834, %v1833
    %v2159 = vpack.c.b16 %v1836, %v1835
    %v2160 = vpack.c.b16 %v1838, %v1837
    %v2161 = vpack.c.b16 %v1840, %v1839
    %v2162 = vpack.c.b16 %v1842, %v1841
    %v2163 = vpack.c.b16 %v1844, %v1843
    %v2164 = vpack.c.b16 %v1846, %v1845
    %v2165 = vpack.c.b16 %v1848, %v1847
    %v2166 = vpack.c.b16 %v1850, %v1849
    %v2167 = vpack.c.b16 %v1852, %v1851
    %v2168 = vpack.c.b16 %v1854, %v1853
    %v2169 = vpack.c.b16 %v1856, %v1855
    %v2170 = vpack.c.b16 %v1858, %v1857
    %v2171 = vpack.c.b16 %v1860, %v1859
    %v2172 = vpack.c.b16 %v1862, %v1861
    %v2173 = vpack.c.b16 %v1864, %v1863
    %v2174 = vpack.c.b16 %v1866, %v1865
    %v2175 = vpack.c.b16 %v1868, %v1867
    %v2176 = vpack.c.b16 %v1870, %v1869
    %v2177 = vpack.c.b16 %v1872, %v1871
    %v2178 = vpack.c.b16 %v1874, %v1873
    %v2179 = vpack.c.b16 %v1876, %v1875
    %v2180 = vpack.c.b16 %v1878, %v1877
    %v2181 = vpack.c.b16 %v1880, %v1879
    %v2182 = vpack.c.b16 %v1882, %v1881
    %v2183 = vpack.c.b16 %v1884, %v1883
    %v2184 = vpack.c.b16 %v1886, %v1885
    %v2185 = vpack.c.b16 %v1888, %v1887
    %v2186 = vpack.c.b16 %v1890, %v1889
    %v2187 = vpack.c.b16 %v1892, %v1891
    %v2188 = vpack.c.b16 %v1894, %v1893
    %v2189 = vpack.c.b16 %v1896, %v1895
    %v2190 = vpack.c.b16 %v1898, %v1897
    %v2191 = vpack.c.b16 %v1900, %v1899
    %v2192 = vpack.c.b16 %v1902, %v1901
    %v2193 = vpack.c.b16 %v1904, %v1903
    %v2194 = vpack.c.b16 %v1906, %v1905
    %v2195 = vpack.c.b16 %v1908, %v1907
    %v2196 = vpack.c.b16 %v1910, %v1909
    %v2197 = vpack.c.b16 %v1912, %v1911
    %v2198 = vpack.c.b16 %v1914, %v1913
    %v2199 = vpack.c.b16 %v1916, %v1915
    %v2200 = vpack.c.b16 %v1918, %v1917
    %v2201 = vpack.c.b16 %v1920, %v1919
    %v2202 = vpack.c.b16 %v1922, %v1921
    %v2203 = vpack.c.b16 %v1924, %v1923
    %v2204 = vpack.c.b16 %v1926, %v1925
    %v2205 = vpack.c.b16 %v1928, %v1927
    %v2206 = vpack.c.b16 %v1930, %v1929
    %v2207 = vpack.c.b16 %v1932, %v1931
    %v2208 = vpack.c.b16 %v1934, %v1933
    %v2209 = vpack.c.b16 %v1936, %v1935
    %v2210 = vpack.c.b16 %v1938, %v1937
    %v2211 = vpack.c.b16 %v1940, %v1939
    %v2212 = vpack.c.b16 %v1942, %v1941
    %v2213 = vpack.c.b16 %v1944, %v1943
    %v2214 = vpack.c.b16 %v1946, %v1945
    %v2215 = vpack.c.b16 %v1948, %v1947
    %v2216 = vpack.c.b16 %v1950, %v1949
    %v2217 = vpack.c.b16 %v1952, %v1951
    %v2218 = vpack.c.b16 %v1954, %v1953
    %v2219 = vpack.c.b16 %v1956, %v1955
    %v2220 = vpack.c.b16 %v1958, %v1957
    %v2221 = vpack.c.b16 %v1960, %v1959
    %v2222 = vpack.c.b16 %v1962, %v1961
    %v2223 = vpack.c.b16 %v1964, %v1963
    %v2224 = vpack.c.b16 %v1966, %v1965
    %v2225 = vpack.c.b16 %v1968, %v1967
    %v2226 = vpack.c.b16 %v1970, %v1969
    %2483 = vmatprep.subr.bf16.mxu0 0
    %2484 = vmatpush1.bf16.msra.mxu0 %v1978
    %2485 = vmatprep.subr.bf16.mxu0 0
    %2486 = vmatpush1.bf16.msra.mxu0 %v1977
    %2487 = vmatprep.subr.bf16.mxu0 0
    %2488 = vmatpush1.bf16.msra.mxu0 %v1976
    %2489 = vmatprep.subr.bf16.mxu0 0
    %2490 = vmatpush1.bf16.msra.mxu0 %v1975
    %2491 = vmatprep.subr.bf16.mxu0 0
    %2492 = vmatpush1.bf16.msra.mxu0 %v1974
    %2493 = vmatprep.subr.bf16.mxu0 0
    %2494 = vmatpush1.bf16.msra.mxu0 %v1973
    %2495 = vmatprep.subr.bf16.mxu0 0
    %2496 = vmatpush1.bf16.msra.mxu0 %v1972
    %2497 = vmatprep.subr.bf16.mxu0 0
    %2498 = vmatpush1.bf16.msra.mxu0 %v1971
    %2499 = vmatprep.subr.bf16.mxu0 0
    %2500 = vmatpush2.bf16.msra.mxu0 %v1986
    %2501 = vmatprep.subr.bf16.mxu0 0
    %2502 = vmatpush2.bf16.msra.mxu0 %v1985
    %2503 = vmatprep.subr.bf16.mxu0 0
    %2504 = vmatpush2.bf16.msra.mxu0 %v1984
    %2505 = vmatprep.subr.bf16.mxu0 0
    %2506 = vmatpush2.bf16.msra.mxu0 %v1983
    %2507 = vmatprep.subr.bf16.mxu0 0
    %2508 = vmatpush2.bf16.msra.mxu0 %v1982
    %2509 = vmatprep.subr.bf16.mxu0 0
    %2510 = vmatpush2.bf16.msra.mxu0 %v1981
    %2511 = vmatprep.subr.bf16.mxu0 0
    %2512 = vmatpush2.bf16.msra.mxu0 %v1980
    %2513 = vmatprep.subr.bf16.mxu0 0
    %2514 = vmatpush2.bf16.msra.mxu0 %v1979
    %2515 = vmatprep.mubr.bf16.mxu0 %v313
    %2516 = vmatmul.mubr.bf16.gmra.mxu0 %v312
    %v2517 = vpop.f32.mrf.mxu0
    %v2518 = vadd.f32 %v945, %v2517
    %v2519 = vpop.f32.mrf.mxu0
    %v2520 = vpop.f32.mrf.mxu0
    %v2521 = vpop.f32.mrf.mxu0
    %2522 = vdwg.mxu0
    %2523 = vmatprep.subr.bf16.mxu0 0
    %2524 = vmatpush1.bf16.msra.mxu0 %v1994
    %2525 = vmatprep.subr.bf16.mxu0 0
    %2526 = vmatpush1.bf16.msra.mxu0 %v1993
    %2527 = vmatprep.subr.bf16.mxu0 0
    %2528 = vmatpush1.bf16.msra.mxu0 %v1992
    %2529 = vmatprep.subr.bf16.mxu0 0
    %2530 = vmatpush1.bf16.msra.mxu0 %v1991
    %2531 = vmatprep.subr.bf16.mxu0 0
    %2532 = vmatpush1.bf16.msra.mxu0 %v1990
    %2533 = vmatprep.subr.bf16.mxu0 0
    %2534 = vmatpush1.bf16.msra.mxu0 %v1989
    %2535 = vmatprep.subr.bf16.mxu0 0
    %2536 = vmatpush1.bf16.msra.mxu0 %v1988
    %2537 = vmatprep.subr.bf16.mxu0 0
    %2538 = vmatpush1.bf16.msra.mxu0 %v1987
    %2539 = vmatprep.subr.bf16.mxu0 0
    %2540 = vmatpush2.bf16.msra.mxu0 %v2002
    %2541 = vmatprep.subr.bf16.mxu0 0
    %2542 = vmatpush2.bf16.msra.mxu0 %v2001
    %2543 = vmatprep.subr.bf16.mxu0 0
    %2544 = vmatpush2.bf16.msra.mxu0 %v2000
    %2545 = vmatprep.subr.bf16.mxu0 0
    %2546 = vmatpush2.bf16.msra.mxu0 %v1999
    %2547 = vmatprep.subr.bf16.mxu0 0
    %2548 = vmatpush2.bf16.msra.mxu0 %v1998
    %2549 = vmatprep.subr.bf16.mxu0 0
    %2550 = vmatpush2.bf16.msra.mxu0 %v1997
    %2551 = vmatprep.subr.bf16.mxu0 0
    %2552 = vmatpush2.bf16.msra.mxu0 %v1996
    %2553 = vmatprep.subr.bf16.mxu0 0
    %2554 = vmatpush2.bf16.msra.mxu0 %v1995
    %2555 = vmatprep.mubr.bf16.mxu0 %v315
    %2556 = vmatmul.mubr.bf16.gmra.mxu0 %v314
    %v2557 = vpop.f32.mrf.mxu0
    %v2558 = vadd.f32 %v2518, %v2557
    %v2559 = vpop.f32.mrf.mxu0
    %v2560 = vpop.f32.mrf.mxu0
    %v2561 = vpop.f32.mrf.mxu0
    %2562 = vdwg.mxu0
    %2563 = vmatprep.subr.bf16.mxu0 0
    %2564 = vmatpush1.bf16.msra.mxu0 %v2010
    %2565 = vmatprep.subr.bf16.mxu0 0
    %2566 = vmatpush1.bf16.msra.mxu0 %v2009
    %2567 = vmatprep.subr.bf16.mxu0 0
    %2568 = vmatpush1.bf16.msra.mxu0 %v2008
    %2569 = vmatprep.subr.bf16.mxu0 0
    %2570 = vmatpush1.bf16.msra.mxu0 %v2007
    %2571 = vmatprep.subr.bf16.mxu0 0
    %2572 = vmatpush1.bf16.msra.mxu0 %v2006
    %2573 = vmatprep.subr.bf16.mxu0 0
    %2574 = vmatpush1.bf16.msra.mxu0 %v2005
    %2575 = vmatprep.subr.bf16.mxu0 0
    %2576 = vmatpush1.bf16.msra.mxu0 %v2004
    %2577 = vmatprep.subr.bf16.mxu0 0
    %2578 = vmatpush1.bf16.msra.mxu0 %v2003
    %2579 = vmatprep.subr.bf16.mxu0 0
    %2580 = vmatpush2.bf16.msra.mxu0 %v2018
    %2581 = vmatprep.subr.bf16.mxu0 0
    %2582 = vmatpush2.bf16.msra.mxu0 %v2017
    %2583 = vmatprep.subr.bf16.mxu0 0
    %2584 = vmatpush2.bf16.msra.mxu0 %v2016
    %2585 = vmatprep.subr.bf16.mxu0 0
    %2586 = vmatpush2.bf16.msra.mxu0 %v2015
    %2587 = vmatprep.subr.bf16.mxu0 0
    %2588 = vmatpush2.bf16.msra.mxu0 %v2014
    %2589 = vmatprep.subr.bf16.mxu0 0
    %2590 = vmatpush2.bf16.msra.mxu0 %v2013
    %2591 = vmatprep.subr.bf16.mxu0 0
    %2592 = vmatpush2.bf16.msra.mxu0 %v2012
    %2593 = vmatprep.subr.bf16.mxu0 0
    %2594 = vmatpush2.bf16.msra.mxu0 %v2011
    %2595 = vmatprep.mubr.bf16.mxu0 %v317
    %2596 = vmatmul.mubr.bf16.gmra.mxu0 %v316
    %v2597 = vpop.f32.mrf.mxu0
    %v2598 = vadd.f32 %v2558, %v2597
    %v2599 = vpop.f32.mrf.mxu0
    %v2600 = vpop.f32.mrf.mxu0
    %v2601 = vpop.f32.mrf.mxu0
    %2602 = vdwg.mxu0
    %2603 = vmatprep.subr.bf16.mxu0 0
    %2604 = vmatpush1.bf16.msra.mxu0 %v2026
    %2605 = vmatprep.subr.bf16.mxu0 0
    %2606 = vmatpush1.bf16.msra.mxu0 %v2025
    %2607 = vmatprep.subr.bf16.mxu0 0
    %2608 = vmatpush1.bf16.msra.mxu0 %v2024
    %2609 = vmatprep.subr.bf16.mxu0 0
    %2610 = vmatpush1.bf16.msra.mxu0 %v2023
    %2611 = vmatprep.subr.bf16.mxu0 0
    %2612 = vmatpush1.bf16.msra.mxu0 %v2022
    %2613 = vmatprep.subr.bf16.mxu0 0
    %2614 = vmatpush1.bf16.msra.mxu0 %v2021
    %2615 = vmatprep.subr.bf16.mxu0 0
    %2616 = vmatpush1.bf16.msra.mxu0 %v2020
    %2617 = vmatprep.subr.bf16.mxu0 0
    %2618 = vmatpush1.bf16.msra.mxu0 %v2019
    %2619 = vmatprep.subr.bf16.mxu0 0
    %2620 = vmatpush2.bf16.msra.mxu0 %v2034
    %2621 = vmatprep.subr.bf16.mxu0 0
    %2622 = vmatpush2.bf16.msra.mxu0 %v2033
    %2623 = vmatprep.subr.bf16.mxu0 0
    %2624 = vmatpush2.bf16.msra.mxu0 %v2032
    %2625 = vmatprep.subr.bf16.mxu0 0
    %2626 = vmatpush2.bf16.msra.mxu0 %v2031
    %2627 = vmatprep.subr.bf16.mxu0 0
    %2628 = vmatpush2.bf16.msra.mxu0 %v2030
    %2629 = vmatprep.subr.bf16.mxu0 0
    %2630 = vmatpush2.bf16.msra.mxu0 %v2029
    %2631 = vmatprep.subr.bf16.mxu0 0
    %2632 = vmatpush2.bf16.msra.mxu0 %v2028
    %2633 = vmatprep.subr.bf16.mxu0 0
    %2634 = vmatpush2.bf16.msra.mxu0 %v2027
    %2635 = vmatprep.mubr.bf16.mxu0 %v319
    %2636 = vmatmul.mubr.bf16.gmra.mxu0 %v318
    %v2637 = vpop.f32.mrf.mxu0
    %v2638 = vadd.f32 %v2598, %v2637
    %v2639 = vpop.f32.mrf.mxu0
    %v2640 = vpop.f32.mrf.mxu0
    %v2641 = vpop.f32.mrf.mxu0
    %2642 = vdwg.mxu0
    %2643 = vmatprep.subr.bf16.mxu0 0
    %2644 = vmatpush1.bf16.msra.mxu0 %v2042
    %2645 = vmatprep.subr.bf16.mxu0 0
    %2646 = vmatpush1.bf16.msra.mxu0 %v2041
    %2647 = vmatprep.subr.bf16.mxu0 0
    %2648 = vmatpush1.bf16.msra.mxu0 %v2040
    %2649 = vmatprep.subr.bf16.mxu0 0
    %2650 = vmatpush1.bf16.msra.mxu0 %v2039
    %2651 = vmatprep.subr.bf16.mxu0 0
    %2652 = vmatpush1.bf16.msra.mxu0 %v2038
    %2653 = vmatprep.subr.bf16.mxu0 0
    %2654 = vmatpush1.bf16.msra.mxu0 %v2037
    %2655 = vmatprep.subr.bf16.mxu0 0
    %2656 = vmatpush1.bf16.msra.mxu0 %v2036
    %2657 = vmatprep.subr.bf16.mxu0 0
    %2658 = vmatpush1.bf16.msra.mxu0 %v2035
    %2659 = vmatprep.subr.bf16.mxu0 0
    %2660 = vmatpush2.bf16.msra.mxu0 %v2050
    %2661 = vmatprep.subr.bf16.mxu0 0
    %2662 = vmatpush2.bf16.msra.mxu0 %v2049
    %2663 = vmatprep.subr.bf16.mxu0 0
    %2664 = vmatpush2.bf16.msra.mxu0 %v2048
    %2665 = vmatprep.subr.bf16.mxu0 0
    %2666 = vmatpush2.bf16.msra.mxu0 %v2047
    %2667 = vmatprep.subr.bf16.mxu0 0
    %2668 = vmatpush2.bf16.msra.mxu0 %v2046
    %2669 = vmatprep.subr.bf16.mxu0 0
    %2670 = vmatpush2.bf16.msra.mxu0 %v2045
    %2671 = vmatprep.subr.bf16.mxu0 0
    %2672 = vmatpush2.bf16.msra.mxu0 %v2044
    %2673 = vmatprep.subr.bf16.mxu0 0
    %2674 = vmatpush2.bf16.msra.mxu0 %v2043
    %2675 = vmatprep.mubr.bf16.mxu0 %v321
    %2676 = vmatmul.mubr.bf16.gmra.mxu0 %v320
    %v2677 = vpop.f32.mrf.mxu0
    %v2678 = vadd.f32 %v2638, %v2677
    %v2679 = vpop.f32.mrf.mxu0
    %v2680 = vpop.f32.mrf.mxu0
    %v2681 = vpop.f32.mrf.mxu0
    %2682 = vdwg.mxu0
    %2683 = vmatprep.subr.bf16.mxu0 0
    %2684 = vmatpush1.bf16.msra.mxu0 %v2058
    %2685 = vmatprep.subr.bf16.mxu0 0
    %2686 = vmatpush1.bf16.msra.mxu0 %v2057
    %2687 = vmatprep.subr.bf16.mxu0 0
    %2688 = vmatpush1.bf16.msra.mxu0 %v2056
    %2689 = vmatprep.subr.bf16.mxu0 0
    %2690 = vmatpush1.bf16.msra.mxu0 %v2055
    %2691 = vmatprep.subr.bf16.mxu0 0
    %2692 = vmatpush1.bf16.msra.mxu0 %v2054
    %2693 = vmatprep.subr.bf16.mxu0 0
    %2694 = vmatpush1.bf16.msra.mxu0 %v2053
    %2695 = vmatprep.subr.bf16.mxu0 0
    %2696 = vmatpush1.bf16.msra.mxu0 %v2052
    %2697 = vmatprep.subr.bf16.mxu0 0
    %2698 = vmatpush1.bf16.msra.mxu0 %v2051
    %2699 = vmatprep.subr.bf16.mxu0 0
    %2700 = vmatpush2.bf16.msra.mxu0 %v2066
    %2701 = vmatprep.subr.bf16.mxu0 0
    %2702 = vmatpush2.bf16.msra.mxu0 %v2065
    %2703 = vmatprep.subr.bf16.mxu0 0
    %2704 = vmatpush2.bf16.msra.mxu0 %v2064
    %2705 = vmatprep.subr.bf16.mxu0 0
    %2706 = vmatpush2.bf16.msra.mxu0 %v2063
    %2707 = vmatprep.subr.bf16.mxu0 0
    %2708 = vmatpush2.bf16.msra.mxu0 %v2062
    %2709 = vmatprep.subr.bf16.mxu0 0
    %2710 = vmatpush2.bf16.msra.mxu0 %v2061
    %2711 = vmatprep.subr.bf16.mxu0 0
    %2712 = vmatpush2.bf16.msra.mxu0 %v2060
    %2713 = vmatprep.subr.bf16.mxu0 0
    %2714 = vmatpush2.bf16.msra.mxu0 %v2059
    %2715 = vmatprep.mubr.bf16.mxu0 %v323
    %2716 = vmatmul.mubr.bf16.gmra.mxu0 %v322
    %v2717 = vpop.f32.mrf.mxu0
    %v2718 = vadd.f32 %v2678, %v2717
    %v2719 = vpop.f32.mrf.mxu0
    %v2720 = vpop.f32.mrf.mxu0
    %v2721 = vpop.f32.mrf.mxu0
    %2722 = vdwg.mxu0
    %2723 = vmatprep.subr.bf16.mxu0 0
    %2724 = vmatpush1.bf16.msra.mxu0 %v2074
    %2725 = vmatprep.subr.bf16.mxu0 0
    %2726 = vmatpush1.bf16.msra.mxu0 %v2073
    %2727 = vmatprep.subr.bf16.mxu0 0
    %2728 = vmatpush1.bf16.msra.mxu0 %v2072
    %2729 = vmatprep.subr.bf16.mxu0 0
    %2730 = vmatpush1.bf16.msra.mxu0 %v2071
    %2731 = vmatprep.subr.bf16.mxu0 0
    %2732 = vmatpush1.bf16.msra.mxu0 %v2070
    %2733 = vmatprep.subr.bf16.mxu0 0
    %2734 = vmatpush1.bf16.msra.mxu0 %v2069
    %2735 = vmatprep.subr.bf16.mxu0 0
    %2736 = vmatpush1.bf16.msra.mxu0 %v2068
    %2737 = vmatprep.subr.bf16.mxu0 0
    %2738 = vmatpush1.bf16.msra.mxu0 %v2067
    %2739 = vmatprep.subr.bf16.mxu0 0
    %2740 = vmatpush2.bf16.msra.mxu0 %v2082
    %2741 = vmatprep.subr.bf16.mxu0 0
    %2742 = vmatpush2.bf16.msra.mxu0 %v2081
    %2743 = vmatprep.subr.bf16.mxu0 0
    %2744 = vmatpush2.bf16.msra.mxu0 %v2080
    %2745 = vmatprep.subr.bf16.mxu0 0
    %2746 = vmatpush2.bf16.msra.mxu0 %v2079
    %2747 = vmatprep.subr.bf16.mxu0 0
    %2748 = vmatpush2.bf16.msra.mxu0 %v2078
    %2749 = vmatprep.subr.bf16.mxu0 0
    %2750 = vmatpush2.bf16.msra.mxu0 %v2077
    %2751 = vmatprep.subr.bf16.mxu0 0
    %2752 = vmatpush2.bf16.msra.mxu0 %v2076
    %2753 = vmatprep.subr.bf16.mxu0 0
    %2754 = vmatpush2.bf16.msra.mxu0 %v2075
    %2755 = vmatprep.mubr.bf16.mxu0 %v325
    %2756 = vmatmul.mubr.bf16.gmra.mxu0 %v324
    %v2757 = vpop.f32.mrf.mxu0
    %v2758 = vadd.f32 %v2718, %v2757
    %v2759 = vpop.f32.mrf.mxu0
    %v2760 = vpop.f32.mrf.mxu0
    %v2761 = vpop.f32.mrf.mxu0
    %2762 = vdwg.mxu0
    %2763 = vmatprep.subr.bf16.mxu0 0
    %2764 = vmatpush1.bf16.msra.mxu0 %v2090
    %2765 = vmatprep.subr.bf16.mxu0 0
    %2766 = vmatpush1.bf16.msra.mxu0 %v2089
    %2767 = vmatprep.subr.bf16.mxu0 0
    %2768 = vmatpush1.bf16.msra.mxu0 %v2088
    %2769 = vmatprep.subr.bf16.mxu0 0
    %2770 = vmatpush1.bf16.msra.mxu0 %v2087
    %2771 = vmatprep.subr.bf16.mxu0 0
    %2772 = vmatpush1.bf16.msra.mxu0 %v2086
    %2773 = vmatprep.subr.bf16.mxu0 0
    %2774 = vmatpush1.bf16.msra.mxu0 %v2085
    %2775 = vmatprep.subr.bf16.mxu0 0
    %2776 = vmatpush1.bf16.msra.mxu0 %v2084
    %2777 = vmatprep.subr.bf16.mxu0 0
    %2778 = vmatpush1.bf16.msra.mxu0 %v2083
    %2779 = vmatprep.subr.bf16.mxu0 0
    %2780 = vmatpush2.bf16.msra.mxu0 %v2098
    %2781 = vmatprep.subr.bf16.mxu0 0
    %2782 = vmatpush2.bf16.msra.mxu0 %v2097
    %2783 = vmatprep.subr.bf16.mxu0 0
    %2784 = vmatpush2.bf16.msra.mxu0 %v2096
    %2785 = vmatprep.subr.bf16.mxu0 0
    %2786 = vmatpush2.bf16.msra.mxu0 %v2095
    %2787 = vmatprep.subr.bf16.mxu0 0
    %2788 = vmatpush2.bf16.msra.mxu0 %v2094
    %2789 = vmatprep.subr.bf16.mxu0 0
    %2790 = vmatpush2.bf16.msra.mxu0 %v2093
    %2791 = vmatprep.subr.bf16.mxu0 0
    %2792 = vmatpush2.bf16.msra.mxu0 %v2092
    %2793 = vmatprep.subr.bf16.mxu0 0
    %2794 = vmatpush2.bf16.msra.mxu0 %v2091
    %2795 = vmatprep.mubr.bf16.mxu0 %v327
    %2796 = vmatmul.mubr.bf16.gmra.mxu0 %v326
    %v2797 = vpop.f32.mrf.mxu0
    %v2798 = vadd.f32 %v2758, %v2797
    %v2799 = vpop.f32.mrf.mxu0
    %v2800 = vpop.f32.mrf.mxu0
    %v2801 = vpop.f32.mrf.mxu0
    %2802 = vdwg.mxu0
    %2803 = vmatprep.subr.bf16.mxu0 0
    %2804 = vmatpush1.bf16.msra.mxu0 %v2106
    %2805 = vmatprep.subr.bf16.mxu0 0
    %2806 = vmatpush1.bf16.msra.mxu0 %v2105
    %2807 = vmatprep.subr.bf16.mxu0 0
    %2808 = vmatpush1.bf16.msra.mxu0 %v2104
    %2809 = vmatprep.subr.bf16.mxu0 0
    %2810 = vmatpush1.bf16.msra.mxu0 %v2103
    %2811 = vmatprep.subr.bf16.mxu0 0
    %2812 = vmatpush1.bf16.msra.mxu0 %v2102
    %2813 = vmatprep.subr.bf16.mxu0 0
    %2814 = vmatpush1.bf16.msra.mxu0 %v2101
    %2815 = vmatprep.subr.bf16.mxu0 0
    %2816 = vmatpush1.bf16.msra.mxu0 %v2100
    %2817 = vmatprep.subr.bf16.mxu0 0
    %2818 = vmatpush1.bf16.msra.mxu0 %v2099
    %2819 = vmatprep.subr.bf16.mxu0 0
    %2820 = vmatpush2.bf16.msra.mxu0 %v2114
    %2821 = vmatprep.subr.bf16.mxu0 0
    %2822 = vmatpush2.bf16.msra.mxu0 %v2113
    %2823 = vmatprep.subr.bf16.mxu0 0
    %2824 = vmatpush2.bf16.msra.mxu0 %v2112
    %2825 = vmatprep.subr.bf16.mxu0 0
    %2826 = vmatpush2.bf16.msra.mxu0 %v2111
    %2827 = vmatprep.subr.bf16.mxu0 0
    %2828 = vmatpush2.bf16.msra.mxu0 %v2110
    %2829 = vmatprep.subr.bf16.mxu0 0
    %2830 = vmatpush2.bf16.msra.mxu0 %v2109
    %2831 = vmatprep.subr.bf16.mxu0 0
    %2832 = vmatpush2.bf16.msra.mxu0 %v2108
    %2833 = vmatprep.subr.bf16.mxu0 0
    %2834 = vmatpush2.bf16.msra.mxu0 %v2107
    %2835 = vmatprep.mubr.bf16.mxu0 %v329
    %2836 = vmatmul.mubr.bf16.gmra.mxu0 %v328
    %v2837 = vpop.f32.mrf.mxu0
    %v2838 = vadd.f32 %v2798, %v2837
    %v2839 = vpop.f32.mrf.mxu0
    %v2840 = vpop.f32.mrf.mxu0
    %v2841 = vpop.f32.mrf.mxu0
    %2842 = vdwg.mxu0
    %2843 = vmatprep.subr.bf16.mxu0 0
    %2844 = vmatpush1.bf16.msra.mxu0 %v2122
    %2845 = vmatprep.subr.bf16.mxu0 0
    %2846 = vmatpush1.bf16.msra.mxu0 %v2121
    %2847 = vmatprep.subr.bf16.mxu0 0
    %2848 = vmatpush1.bf16.msra.mxu0 %v2120
    %2849 = vmatprep.subr.bf16.mxu0 0
    %2850 = vmatpush1.bf16.msra.mxu0 %v2119
    %2851 = vmatprep.subr.bf16.mxu0 0
    %2852 = vmatpush1.bf16.msra.mxu0 %v2118
    %2853 = vmatprep.subr.bf16.mxu0 0
    %2854 = vmatpush1.bf16.msra.mxu0 %v2117
    %2855 = vmatprep.subr.bf16.mxu0 0
    %2856 = vmatpush1.bf16.msra.mxu0 %v2116
    %2857 = vmatprep.subr.bf16.mxu0 0
    %2858 = vmatpush1.bf16.msra.mxu0 %v2115
    %2859 = vmatprep.subr.bf16.mxu0 0
    %2860 = vmatpush2.bf16.msra.mxu0 %v2130
    %2861 = vmatprep.subr.bf16.mxu0 0
    %2862 = vmatpush2.bf16.msra.mxu0 %v2129
    %2863 = vmatprep.subr.bf16.mxu0 0
    %2864 = vmatpush2.bf16.msra.mxu0 %v2128
    %2865 = vmatprep.subr.bf16.mxu0 0
    %2866 = vmatpush2.bf16.msra.mxu0 %v2127
    %2867 = vmatprep.subr.bf16.mxu0 0
    %2868 = vmatpush2.bf16.msra.mxu0 %v2126
    %2869 = vmatprep.subr.bf16.mxu0 0
    %2870 = vmatpush2.bf16.msra.mxu0 %v2125
    %2871 = vmatprep.subr.bf16.mxu0 0
    %2872 = vmatpush2.bf16.msra.mxu0 %v2124
    %2873 = vmatprep.subr.bf16.mxu0 0
    %2874 = vmatpush2.bf16.msra.mxu0 %v2123
    %2875 = vmatprep.mubr.bf16.mxu0 %v331
    %2876 = vmatmul.mubr.bf16.gmra.mxu0 %v330
    %v2877 = vpop.f32.mrf.mxu0
    %v2878 = vadd.f32 %v2838, %v2877
    %v2879 = vpop.f32.mrf.mxu0
    %v2880 = vpop.f32.mrf.mxu0
    %v2881 = vpop.f32.mrf.mxu0
    %2882 = vdwg.mxu0
    %2883 = vmatprep.subr.bf16.mxu0 0
    %2884 = vmatpush1.bf16.msra.mxu0 %v2138
    %2885 = vmatprep.subr.bf16.mxu0 0
    %2886 = vmatpush1.bf16.msra.mxu0 %v2137
    %2887 = vmatprep.subr.bf16.mxu0 0
    %2888 = vmatpush1.bf16.msra.mxu0 %v2136
    %2889 = vmatprep.subr.bf16.mxu0 0
    %2890 = vmatpush1.bf16.msra.mxu0 %v2135
    %2891 = vmatprep.subr.bf16.mxu0 0
    %2892 = vmatpush1.bf16.msra.mxu0 %v2134
    %2893 = vmatprep.subr.bf16.mxu0 0
    %2894 = vmatpush1.bf16.msra.mxu0 %v2133
    %2895 = vmatprep.subr.bf16.mxu0 0
    %2896 = vmatpush1.bf16.msra.mxu0 %v2132
    %2897 = vmatprep.subr.bf16.mxu0 0
    %2898 = vmatpush1.bf16.msra.mxu0 %v2131
    %2899 = vmatprep.subr.bf16.mxu0 0
    %2900 = vmatpush2.bf16.msra.mxu0 %v2146
    %2901 = vmatprep.subr.bf16.mxu0 0
    %2902 = vmatpush2.bf16.msra.mxu0 %v2145
    %2903 = vmatprep.subr.bf16.mxu0 0
    %2904 = vmatpush2.bf16.msra.mxu0 %v2144
    %2905 = vmatprep.subr.bf16.mxu0 0
    %2906 = vmatpush2.bf16.msra.mxu0 %v2143
    %2907 = vmatprep.subr.bf16.mxu0 0
    %2908 = vmatpush2.bf16.msra.mxu0 %v2142
    %2909 = vmatprep.subr.bf16.mxu0 0
    %2910 = vmatpush2.bf16.msra.mxu0 %v2141
    %2911 = vmatprep.subr.bf16.mxu0 0
    %2912 = vmatpush2.bf16.msra.mxu0 %v2140
    %2913 = vmatprep.subr.bf16.mxu0 0
    %2914 = vmatpush2.bf16.msra.mxu0 %v2139
    %2915 = vmatprep.mubr.bf16.mxu0 %v333
    %2916 = vmatmul.mubr.bf16.gmra.mxu0 %v332
    %v2917 = vpop.f32.mrf.mxu0
    %v2918 = vadd.f32 %v2878, %v2917
    %v2919 = vpop.f32.mrf.mxu0
    %v2920 = vpop.f32.mrf.mxu0
    %v2921 = vpop.f32.mrf.mxu0
    %2922 = vdwg.mxu0
    %2923 = vmatprep.subr.bf16.mxu0 0
    %2924 = vmatpush1.bf16.msra.mxu0 %v2154
    %2925 = vmatprep.subr.bf16.mxu0 0
    %2926 = vmatpush1.bf16.msra.mxu0 %v2153
    %2927 = vmatprep.subr.bf16.mxu0 0
    %2928 = vmatpush1.bf16.msra.mxu0 %v2152
    %2929 = vmatprep.subr.bf16.mxu0 0
    %2930 = vmatpush1.bf16.msra.mxu0 %v2151
    %2931 = vmatprep.subr.bf16.mxu0 0
    %2932 = vmatpush1.bf16.msra.mxu0 %v2150
    %2933 = vmatprep.subr.bf16.mxu0 0
    %2934 = vmatpush1.bf16.msra.mxu0 %v2149
    %2935 = vmatprep.subr.bf16.mxu0 0
    %2936 = vmatpush1.bf16.msra.mxu0 %v2148
    %2937 = vmatprep.subr.bf16.mxu0 0
    %2938 = vmatpush1.bf16.msra.mxu0 %v2147
    %2939 = vmatprep.subr.bf16.mxu0 0
    %2940 = vmatpush2.bf16.msra.mxu0 %v2162
    %2941 = vmatprep.subr.bf16.mxu0 0
    %2942 = vmatpush2.bf16.msra.mxu0 %v2161
    %2943 = vmatprep.subr.bf16.mxu0 0
    %2944 = vmatpush2.bf16.msra.mxu0 %v2160
    %2945 = vmatprep.subr.bf16.mxu0 0
    %2946 = vmatpush2.bf16.msra.mxu0 %v2159
    %2947 = vmatprep.subr.bf16.mxu0 0
    %2948 = vmatpush2.bf16.msra.mxu0 %v2158
    %2949 = vmatprep.subr.bf16.mxu0 0
    %2950 = vmatpush2.bf16.msra.mxu0 %v2157
    %2951 = vmatprep.subr.bf16.mxu0 0
    %2952 = vmatpush2.bf16.msra.mxu0 %v2156
    %2953 = vmatprep.subr.bf16.mxu0 0
    %2954 = vmatpush2.bf16.msra.mxu0 %v2155
    %2955 = vmatprep.mubr.bf16.mxu0 %v335
    %2956 = vmatmul.mubr.bf16.gmra.mxu0 %v334
    %v2957 = vpop.f32.mrf.mxu0
    %v2958 = vadd.f32 %v2918, %v2957
    %v2959 = vpop.f32.mrf.mxu0
    %v2960 = vpop.f32.mrf.mxu0
    %v2961 = vpop.f32.mrf.mxu0
    %2962 = vdwg.mxu0
    %2963 = vmatprep.subr.bf16.mxu0 0
    %2964 = vmatpush1.bf16.msra.mxu0 %v2170
    %2965 = vmatprep.subr.bf16.mxu0 0
    %2966 = vmatpush1.bf16.msra.mxu0 %v2169
    %2967 = vmatprep.subr.bf16.mxu0 0
    %2968 = vmatpush1.bf16.msra.mxu0 %v2168
    %2969 = vmatprep.subr.bf16.mxu0 0
    %2970 = vmatpush1.bf16.msra.mxu0 %v2167
    %2971 = vmatprep.subr.bf16.mxu0 0
    %2972 = vmatpush1.bf16.msra.mxu0 %v2166
    %2973 = vmatprep.subr.bf16.mxu0 0
    %2974 = vmatpush1.bf16.msra.mxu0 %v2165
    %2975 = vmatprep.subr.bf16.mxu0 0
    %2976 = vmatpush1.bf16.msra.mxu0 %v2164
    %2977 = vmatprep.subr.bf16.mxu0 0
    %2978 = vmatpush1.bf16.msra.mxu0 %v2163
    %2979 = vmatprep.subr.bf16.mxu0 0
    %2980 = vmatpush2.bf16.msra.mxu0 %v2178
    %2981 = vmatprep.subr.bf16.mxu0 0
    %2982 = vmatpush2.bf16.msra.mxu0 %v2177
    %2983 = vmatprep.subr.bf16.mxu0 0
    %2984 = vmatpush2.bf16.msra.mxu0 %v2176
    %2985 = vmatprep.subr.bf16.mxu0 0
    %2986 = vmatpush2.bf16.msra.mxu0 %v2175
    %2987 = vmatprep.subr.bf16.mxu0 0
    %2988 = vmatpush2.bf16.msra.mxu0 %v2174
    %2989 = vmatprep.subr.bf16.mxu0 0
    %2990 = vmatpush2.bf16.msra.mxu0 %v2173
    %2991 = vmatprep.subr.bf16.mxu0 0
    %2992 = vmatpush2.bf16.msra.mxu0 %v2172
    %2993 = vmatprep.subr.bf16.mxu0 0
    %2994 = vmatpush2.bf16.msra.mxu0 %v2171
    %2995 = vmatprep.mubr.bf16.mxu0 %v337
    %2996 = vmatmul.mubr.bf16.gmra.mxu0 %v336
    %v2997 = vpop.f32.mrf.mxu0
    %v2998 = vadd.f32 %v2958, %v2997
    %v2999 = vpop.f32.mrf.mxu0
    %v3000 = vpop.f32.mrf.mxu0
    %v3001 = vpop.f32.mrf.mxu0
    %3002 = vdwg.mxu0
    %3003 = vmatprep.subr.bf16.mxu0 0
    %3004 = vmatpush1.bf16.msra.mxu0 %v2186
    %3005 = vmatprep.subr.bf16.mxu0 0
    %3006 = vmatpush1.bf16.msra.mxu0 %v2185
    %3007 = vmatprep.subr.bf16.mxu0 0
    %3008 = vmatpush1.bf16.msra.mxu0 %v2184
    %3009 = vmatprep.subr.bf16.mxu0 0
    %3010 = vmatpush1.bf16.msra.mxu0 %v2183
    %3011 = vmatprep.subr.bf16.mxu0 0
    %3012 = vmatpush1.bf16.msra.mxu0 %v2182
    %3013 = vmatprep.subr.bf16.mxu0 0
    %3014 = vmatpush1.bf16.msra.mxu0 %v2181
    %3015 = vmatprep.subr.bf16.mxu0 0
    %3016 = vmatpush1.bf16.msra.mxu0 %v2180
    %3017 = vmatprep.subr.bf16.mxu0 0
    %3018 = vmatpush1.bf16.msra.mxu0 %v2179
    %3019 = vmatprep.subr.bf16.mxu0 0
    %3020 = vmatpush2.bf16.msra.mxu0 %v2194
    %3021 = vmatprep.subr.bf16.mxu0 0
    %3022 = vmatpush2.bf16.msra.mxu0 %v2193
    %3023 = vmatprep.subr.bf16.mxu0 0
    %3024 = vmatpush2.bf16.msra.mxu0 %v2192
    %3025 = vmatprep.subr.bf16.mxu0 0
    %3026 = vmatpush2.bf16.msra.mxu0 %v2191
    %3027 = vmatprep.subr.bf16.mxu0 0
    %3028 = vmatpush2.bf16.msra.mxu0 %v2190
    %3029 = vmatprep.subr.bf16.mxu0 0
    %3030 = vmatpush2.bf16.msra.mxu0 %v2189
    %3031 = vmatprep.subr.bf16.mxu0 0
    %3032 = vmatpush2.bf16.msra.mxu0 %v2188
    %3033 = vmatprep.subr.bf16.mxu0 0
    %3034 = vmatpush2.bf16.msra.mxu0 %v2187
    %3035 = vmatprep.mubr.bf16.mxu0 %v339
    %3036 = vmatmul.mubr.bf16.gmra.mxu0 %v338
    %v3037 = vpop.f32.mrf.mxu0
    %v3038 = vadd.f32 %v2998, %v3037
    %v3039 = vpop.f32.mrf.mxu0
    %v3040 = vpop.f32.mrf.mxu0
    %v3041 = vpop.f32.mrf.mxu0
    %3042 = vdwg.mxu0
    %3043 = vmatprep.subr.bf16.mxu0 0
    %3044 = vmatpush1.bf16.msra.mxu0 %v2202
    %3045 = vmatprep.subr.bf16.mxu0 0
    %3046 = vmatpush1.bf16.msra.mxu0 %v2201
    %3047 = vmatprep.subr.bf16.mxu0 0
    %3048 = vmatpush1.bf16.msra.mxu0 %v2200
    %3049 = vmatprep.subr.bf16.mxu0 0
    %3050 = vmatpush1.bf16.msra.mxu0 %v2199
    %3051 = vmatprep.subr.bf16.mxu0 0
    %3052 = vmatpush1.bf16.msra.mxu0 %v2198
    %3053 = vmatprep.subr.bf16.mxu0 0
    %3054 = vmatpush1.bf16.msra.mxu0 %v2197
    %3055 = vmatprep.subr.bf16.mxu0 0
    %3056 = vmatpush1.bf16.msra.mxu0 %v2196
    %3057 = vmatprep.subr.bf16.mxu0 0
    %3058 = vmatpush1.bf16.msra.mxu0 %v2195
    %3059 = vmatprep.subr.bf16.mxu0 0
    %3060 = vmatpush2.bf16.msra.mxu0 %v2210
    %3061 = vmatprep.subr.bf16.mxu0 0
    %3062 = vmatpush2.bf16.msra.mxu0 %v2209
    %3063 = vmatprep.subr.bf16.mxu0 0
    %3064 = vmatpush2.bf16.msra.mxu0 %v2208
    %3065 = vmatprep.subr.bf16.mxu0 0
    %3066 = vmatpush2.bf16.msra.mxu0 %v2207
    %3067 = vmatprep.subr.bf16.mxu0 0
    %3068 = vmatpush2.bf16.msra.mxu0 %v2206
    %3069 = vmatprep.subr.bf16.mxu0 0
    %3070 = vmatpush2.bf16.msra.mxu0 %v2205
    %3071 = vmatprep.subr.bf16.mxu0 0
    %3072 = vmatpush2.bf16.msra.mxu0 %v2204
    %3073 = vmatprep.subr.bf16.mxu0 0
    %3074 = vmatpush2.bf16.msra.mxu0 %v2203
    %3075 = vmatprep.mubr.bf16.mxu0 %v341
    %3076 = vmatmul.mubr.bf16.gmra.mxu0 %v340
    %v3077 = vpop.f32.mrf.mxu0
    %v3078 = vadd.f32 %v3038, %v3077
    %v3079 = vpop.f32.mrf.mxu0
    %v3080 = vpop.f32.mrf.mxu0
    %v3081 = vpop.f32.mrf.mxu0
    %3082 = vdwg.mxu0
    %3083 = vmatprep.subr.bf16.mxu0 0
    %3084 = vmatpush1.bf16.msra.mxu0 %v2218
    %3085 = vmatprep.subr.bf16.mxu0 0
    %3086 = vmatpush1.bf16.msra.mxu0 %v2217
    %3087 = vmatprep.subr.bf16.mxu0 0
    %3088 = vmatpush1.bf16.msra.mxu0 %v2216
    %3089 = vmatprep.subr.bf16.mxu0 0
    %3090 = vmatpush1.bf16.msra.mxu0 %v2215
    %3091 = vmatprep.subr.bf16.mxu0 0
    %3092 = vmatpush1.bf16.msra.mxu0 %v2214
    %3093 = vmatprep.subr.bf16.mxu0 0
    %3094 = vmatpush1.bf16.msra.mxu0 %v2213
    %3095 = vmatprep.subr.bf16.mxu0 0
    %3096 = vmatpush1.bf16.msra.mxu0 %v2212
    %3097 = vmatprep.subr.bf16.mxu0 0
    %3098 = vmatpush1.bf16.msra.mxu0 %v2211
    %3099 = vmatprep.subr.bf16.mxu0 0
    %3100 = vmatpush2.bf16.msra.mxu0 %v2226
    %3101 = vmatprep.subr.bf16.mxu0 0
    %3102 = vmatpush2.bf16.msra.mxu0 %v2225
    %3103 = vmatprep.subr.bf16.mxu0 0
    %3104 = vmatpush2.bf16.msra.mxu0 %v2224
    %3105 = vmatprep.subr.bf16.mxu0 0
    %3106 = vmatpush2.bf16.msra.mxu0 %v2223
    %3107 = vmatprep.subr.bf16.mxu0 0
    %3108 = vmatpush2.bf16.msra.mxu0 %v2222
    %3109 = vmatprep.subr.bf16.mxu0 0
    %3110 = vmatpush2.bf16.msra.mxu0 %v2221
    %3111 = vmatprep.subr.bf16.mxu0 0
    %3112 = vmatpush2.bf16.msra.mxu0 %v2220
    %3113 = vmatprep.subr.bf16.mxu0 0
    %3114 = vmatpush2.bf16.msra.mxu0 %v2219
    %3115 = vmatprep.mubr.bf16.mxu0 %v343
    %3116 = vmatmul.mubr.bf16.gmra.mxu0 %v342
    %v3117 = vpop.f32.mrf.mxu0
    %v3118 = vadd.f32 %v3078, %v3117
    %v3119 = vpop.f32.mrf.mxu0
    %v3120 = vpop.f32.mrf.mxu0
    %v3121 = vpop.f32.mrf.mxu0
    %3122 = vdwg.mxu0
    %v3123 = vmax.f32 %v3118, 0.0
    %v3124 = vpack.c.bf16 %v427, %v427
    %v3125 = vpack.c.bf16 %v3123, %v3123
    %v3126 = vld [vmem:[#allocation8] sm:$0xf]
    %v3127 = vld [vmem:[#allocation8 + $0x4] sm:$0xf]
    %v3128 = vld [vmem:[#allocation8 + $0x8] sm:$0xf]
    %v3129 = vld [vmem:[#allocation8 + $0xc] sm:$0xf]
    %v3130 = vld [vmem:[#allocation8 + $0x10] sm:$0xf]
    %v3131 = vld [vmem:[#allocation8 + $0x14] sm:$0xf]
    %v3132 = vld [vmem:[#allocation8 + $0x18] sm:$0xf]
    %v3133 = vld [vmem:[#allocation8 + $0x1c] sm:$0xf]
    %v3134 = vld [vmem:[#allocation8 + $0x20] sm:$0xf]
    %v3135 = vld [vmem:[#allocation8 + $0x24] sm:$0xf]
    %v3136 = vld [vmem:[#allocation8 + $0x28] sm:$0xf]
    %v3137 = vld [vmem:[#allocation8 + $0x2c] sm:$0xf]
    %v3138 = vld [vmem:[#allocation8 + $0x30] sm:$0xf]
    %v3139 = vld [vmem:[#allocation8 + $0x34] sm:$0xf]
    %v3140 = vld [vmem:[#allocation8 + $0x38] sm:$0xf]
    %v3141 = vld [vmem:[#allocation8 + $0x3c] sm:$0xf]
    %v3142 = vld [vmem:[#allocation8 + $0x40] sm:$0xf]
    %v3143 = vld [vmem:[#allocation8 + $0x44] sm:$0xf]
    %v3144 = vld [vmem:[#allocation8 + $0x48] sm:$0xf]
    %v3145 = vld [vmem:[#allocation8 + $0x4c] sm:$0xf]
    %v3146 = vld [vmem:[#allocation8 + $0x50] sm:$0xf]
    %v3147 = vld [vmem:[#allocation8 + $0x54] sm:$0xf]
    %v3148 = vld [vmem:[#allocation8 + $0x58] sm:$0xf]
    %v3149 = vld [vmem:[#allocation8 + $0x5c] sm:$0xf]
    %v3150 = vld [vmem:[#allocation8 + $0x60] sm:$0xf]
    %v3151 = vld [vmem:[#allocation8 + $0x64] sm:$0xf]
    %v3152 = vld [vmem:[#allocation8 + $0x68] sm:$0xf]
    %v3153 = vld [vmem:[#allocation8 + $0x6c] sm:$0xf]
    %v3154 = vld [vmem:[#allocation8 + $0x70] sm:$0xf]
    %v3155 = vld [vmem:[#allocation8 + $0x74] sm:$0xf]
    %v3156 = vld [vmem:[#allocation8 + $0x78] sm:$0xf]
    %v3157 = vld [vmem:[#allocation8 + $0x7c] sm:$0xf]
    %v3158 = vld [vmem:[#allocation10] sm:$0x1]
    %v3160 = vlaneseq
    %v3161 = vshrl.u32 %v3160, 7
    %v3162 = vsub.s32 0, %v3161
    %v3163 = vrot.slane %v3158, %v3162
    %v3197 = vunpack.c.l.b16 %v3126
    %v3198 = vunpack.c.l.b16 %v3127
    %v3199 = vunpack.c.l.b16 %v3128
    %v3200 = vunpack.c.l.b16 %v3129
    %v3201 = vunpack.c.l.b16 %v3130
    %v3202 = vunpack.c.l.b16 %v3131
    %v3203 = vunpack.c.l.b16 %v3132
    %v3204 = vunpack.c.l.b16 %v3133
    %v3205 = vunpack.c.l.b16 %v3134
    %v3206 = vunpack.c.l.b16 %v3135
    %v3207 = vunpack.c.l.b16 %v3136
    %v3208 = vunpack.c.l.b16 %v3137
    %v3209 = vunpack.c.l.b16 %v3138
    %v3210 = vunpack.c.l.b16 %v3139
    %v3211 = vunpack.c.l.b16 %v3140
    %v3212 = vunpack.c.l.b16 %v3141
    %v3213 = vunpack.c.l.b16 %v3142
    %v3214 = vunpack.c.l.b16 %v3143
    %v3215 = vunpack.c.l.b16 %v3144
    %v3216 = vunpack.c.l.b16 %v3145
    %v3217 = vunpack.c.l.b16 %v3146
    %v3218 = vunpack.c.l.b16 %v3147
    %v3219 = vunpack.c.l.b16 %v3148
    %v3220 = vunpack.c.l.b16 %v3149
    %v3221 = vunpack.c.l.b16 %v3150
    %v3222 = vunpack.c.l.b16 %v3151
    %v3223 = vunpack.c.l.b16 %v3152
    %v3224 = vunpack.c.l.b16 %v3153
    %v3225 = vunpack.c.l.b16 %v3154
    %v3226 = vunpack.c.l.b16 %v3155
    %v3227 = vunpack.c.l.b16 %v3156
    %v3228 = vunpack.c.l.b16 %v3157
    %v3229 = vpack.c.b16 %v3198, %v3197
    %v3230 = vpack.c.b16 %v3200, %v3199
    %v3231 = vpack.c.b16 %v3202, %v3201
    %v3232 = vpack.c.b16 %v3204, %v3203
    %v3233 = vpack.c.b16 %v3206, %v3205
    %v3234 = vpack.c.b16 %v3208, %v3207
    %v3235 = vpack.c.b16 %v3210, %v3209
    %v3236 = vpack.c.b16 %v3212, %v3211
    %v3237 = vpack.c.b16 %v3214, %v3213
    %v3238 = vpack.c.b16 %v3216, %v3215
    %v3239 = vpack.c.b16 %v3218, %v3217
    %v3240 = vpack.c.b16 %v3220, %v3219
    %v3241 = vpack.c.b16 %v3222, %v3221
    %v3242 = vpack.c.b16 %v3224, %v3223
    %v3243 = vpack.c.b16 %v3226, %v3225
    %v3244 = vpack.c.b16 %v3228, %v3227
    %3261 = vmatprep.subr.bf16.mxu0 0
    %3262 = vmatpush1.bf16.msra.mxu0 %v3236
    %3263 = vmatprep.subr.bf16.mxu0 0
    %3264 = vmatpush1.bf16.msra.mxu0 %v3235
    %3265 = vmatprep.subr.bf16.mxu0 0
    %3266 = vmatpush1.bf16.msra.mxu0 %v3234
    %3267 = vmatprep.subr.bf16.mxu0 0
    %3268 = vmatpush1.bf16.msra.mxu0 %v3233
    %3269 = vmatprep.subr.bf16.mxu0 0
    %3270 = vmatpush1.bf16.msra.mxu0 %v3232
    %3271 = vmatprep.subr.bf16.mxu0 0
    %3272 = vmatpush1.bf16.msra.mxu0 %v3231
    %3273 = vmatprep.subr.bf16.mxu0 0
    %3274 = vmatpush1.bf16.msra.mxu0 %v3230
    %3275 = vmatprep.subr.bf16.mxu0 0
    %3276 = vmatpush1.bf16.msra.mxu0 %v3229
    %3277 = vmatprep.subr.bf16.mxu0 0
    %3278 = vmatpush2.bf16.msra.mxu0 %v3244
    %3279 = vmatprep.subr.bf16.mxu0 0
    %3280 = vmatpush2.bf16.msra.mxu0 %v3243
    %3281 = vmatprep.subr.bf16.mxu0 0
    %3282 = vmatpush2.bf16.msra.mxu0 %v3242
    %3283 = vmatprep.subr.bf16.mxu0 0
    %3284 = vmatpush2.bf16.msra.mxu0 %v3241
    %3285 = vmatprep.subr.bf16.mxu0 0
    %3286 = vmatpush2.bf16.msra.mxu0 %v3240
    %3287 = vmatprep.subr.bf16.mxu0 0
    %3288 = vmatpush2.bf16.msra.mxu0 %v3239
    %3289 = vmatprep.subr.bf16.mxu0 0
    %3290 = vmatpush2.bf16.msra.mxu0 %v3238
    %3291 = vmatprep.subr.bf16.mxu0 0
    %3292 = vmatpush2.bf16.msra.mxu0 %v3237
    %3293 = vmatprep.mubr.bf16.mxu0 %v3125
    %3294 = vmatmul.mubr.bf16.gmra.mxu0 %v3124
    %v3295 = vpop.f32.mrf.mxu0
    %v3296 = vadd.f32 %v3163, %v3295
    %v3297 = vpop.f32.mrf.mxu0
    %v3298 = vpop.f32.mrf.mxu0
    %v3299 = vpop.f32.mrf.mxu0
    %3300 = vdwg.mxu0
    %v3301 = vmax.f32 %v3296, 0.0
    %v3302 = vpack.c.bf16 %v3301, %v3301
    %v3303 = vld [vmem:[#allocation11] sm:$0xf]
    %v3304 = vld [vmem:[#allocation11 + $0x4] sm:$0xf]
    %v3305 = vld [vmem:[#allocation11 + $0x8] sm:$0xf]
    %v3306 = vld [vmem:[#allocation11 + $0xc] sm:$0xf]
    %v3307 = vld [vmem:[#allocation11 + $0x10] sm:$0xf]
    %v3308 = vld [vmem:[#allocation11 + $0x14] sm:$0xf]
    %v3309 = vld [vmem:[#allocation11 + $0x18] sm:$0xf]
    %v3310 = vld [vmem:[#allocation11 + $0x1c] sm:$0xf]
    %v3311 = vld [vmem:[#allocation11 + $0x20] sm:$0xf]
    %v3312 = vld [vmem:[#allocation11 + $0x24] sm:$0xf]
    %v3313 = vld [vmem:[#allocation11 + $0x28] sm:$0xf]
    %v3314 = vld [vmem:[#allocation11 + $0x2c] sm:$0xf]
    %v3315 = vld [vmem:[#allocation11 + $0x30] sm:$0xf]
    %v3316 = vld [vmem:[#allocation11 + $0x34] sm:$0xf]
    %v3317 = vld [vmem:[#allocation11 + $0x38] sm:$0xf]
    %v3318 = vld [vmem:[#allocation11 + $0x3c] sm:$0xf]
    %v3319 = vld [vmem:[#allocation13] sm:$0x1]
    %v3321 = vlaneseq
    %v3322 = vshrl.u32 %v3321, 7
    %v3323 = vsub.s32 0, %v3322
    %v3324 = vrot.slane %v3319, %v3323
    %v3342 = vunpack.c.l.b16 %v3303
    %v3343 = vunpack.c.l.b16 %v3304
    %v3344 = vunpack.c.l.b16 %v3305
    %v3345 = vunpack.c.l.b16 %v3306
    %v3346 = vunpack.c.l.b16 %v3307
    %v3347 = vunpack.c.l.b16 %v3308
    %v3348 = vunpack.c.l.b16 %v3309
    %v3349 = vunpack.c.l.b16 %v3310
    %v3350 = vunpack.c.l.b16 %v3311
    %v3351 = vunpack.c.l.b16 %v3312
    %v3352 = vunpack.c.l.b16 %v3313
    %v3353 = vunpack.c.l.b16 %v3314
    %v3354 = vunpack.c.l.b16 %v3315
    %v3355 = vunpack.c.l.b16 %v3316
    %v3356 = vunpack.c.l.b16 %v3317
    %v3357 = vunpack.c.l.b16 %v3318
    %v3358 = vpack.c.b16 %v3343, %v3342
    %v3359 = vpack.c.b16 %v3345, %v3344
    %v3360 = vpack.c.b16 %v3347, %v3346
    %v3361 = vpack.c.b16 %v3349, %v3348
    %v3362 = vpack.c.b16 %v3351, %v3350
    %v3363 = vpack.c.b16 %v3353, %v3352
    %v3364 = vpack.c.b16 %v3355, %v3354
    %v3365 = vpack.c.b16 %v3357, %v3356
    %3374 = vmatprep.subr.bf16.mxu0 0
    %3375 = vmatpush1.bf16.msra.mxu0 %v3365
    %3376 = vmatprep.subr.bf16.mxu0 0
    %3377 = vmatpush1.bf16.msra.mxu0 %v3364
    %3378 = vmatprep.subr.bf16.mxu0 0
    %3379 = vmatpush1.bf16.msra.mxu0 %v3363
    %3380 = vmatprep.subr.bf16.mxu0 0
    %3381 = vmatpush1.bf16.msra.mxu0 %v3362
    %3382 = vmatprep.subr.bf16.mxu0 0
    %3383 = vmatpush1.bf16.msra.mxu0 %v3361
    %3384 = vmatprep.subr.bf16.mxu0 0
    %3385 = vmatpush1.bf16.msra.mxu0 %v3360
    %3386 = vmatprep.subr.bf16.mxu0 0
    %3387 = vmatpush1.bf16.msra.mxu0 %v3359
    %3388 = vmatprep.subr.bf16.mxu0 0
    %3389 = vmatpush1.bf16.msra.mxu0 %v3358
    %3390 = vmatprep.subr.bf16.mxu0 0
    %3391 = vmatpush2.bf16.msra.mxu0 0
    %3392 = vmatprep.subr.bf16.mxu0 0
    %3393 = vmatpush2.bf16.msra.mxu0 0
    %3394 = vmatprep.subr.bf16.mxu0 0
    %3395 = vmatpush2.bf16.msra.mxu0 0
    %3396 = vmatprep.subr.bf16.mxu0 0
    %3397 = vmatpush2.bf16.msra.mxu0 0
    %3398 = vmatprep.subr.bf16.mxu0 0
    %3399 = vmatpush2.bf16.msra.mxu0 0
    %3400 = vmatprep.subr.bf16.mxu0 0
    %3401 = vmatpush2.bf16.msra.mxu0 0
    %3402 = vmatprep.subr.bf16.mxu0 0
    %3403 = vmatpush2.bf16.msra.mxu0 0
    %3404 = vmatprep.subr.bf16.mxu0 0
    %3405 = vmatpush2.bf16.msra.mxu0 0
    %3406 = vmatprep.mubr.bf16.mxu0 0
    %3407 = vmatmul.mubr.bf16.gmra.mxu0 %v3302
    %v3408 = vpop.f32.mrf.mxu0
    %v3409 = vadd.f32 %v3324, %v3408
    %v3410 = vpop.f32.mrf.mxu0
    %v3411 = vpop.f32.mrf.mxu0
    %v3412 = vpop.f32.mrf.mxu0
    %3413 = vdwg.mxu0
    %v3414 = vpack.c.bf16 %v3409, %v3409
    %3415 = vst [vmem:[#allocation14] sm:$0x1] %v3414
    // Predicated region
    $region70: #{multimodal_forward.1} parent=1 // pred_check
      _
    $region71: #{multimodal_forward.1} parent=1 // pred_check_branch
      %3417 = sbr.rel (0) target = $region73
    $region72: #{multimodal_forward.1} parent=1 // pred_region
      %s3419 = ssub.s32 16, 16
      %3420 = vsyncadd [#allocation4], %s3419
      %s3422 = sshll.u32 [#allocation14], 4
      %s3423 = int_to_ptr.vmem [resolvable:$true] %s3422
      %3425 = dma.vmem_to_hbm [thread:$0]  %s3423, 16, %s10, [#allocation4]
    $region73: #{multimodal_forward.1} parent=1 // pred_fallthru
      _
    // Predicated region
    $region74: #{multimodal_forward.1} parent=1 // pred_check
      _
    $region75: #{multimodal_forward.1} parent=1 // pred_check_branch
      %3427 = sbr.rel (0) target = $region77
    $region76: #{multimodal_forward.1} parent=1 // pred_region
      %3428 = dma.done [#allocation4], 16
    $region77: #{multimodal_forward.1} parent=1 // pred_fallthru
      _
    %3429 = vsyncpa [#allocation3], 1
    %3430 = vsyncpa [#allocation6], 1
    %3431 = vsyncpa [#allocation9], 1
    %3432 = vsyncpa [#allocation12], 1
    %3433 = vsyncpa [#allocation4], 1

</llo_original>
